<compile_context>
chip_gen: v5e
topology: v5e:2x2
jax: 0.10.0
libtpu: 0.0.40
codegen_flags: <defaults>
</compile_context>

<pallas_src>
import jax
import jax.numpy as jnp
from jax.experimental import pallas as pl
from jax.experimental.pallas import tpu as pltpu


# --------------------------------------------------------------------------------------------
# Kernel: runs all T decode steps.  grid=(T,), sequential ("arbitrary"), state in VMEM scratch.
# --------------------------------------------------------------------------------------------
def _decoder_seq_kernel(ids_ref,                                   # SMEM scalar prefetch (T, N)
                        emb_ref, enc_ref, h0_ref, c0_ref,          # resident VMEM inputs
                        wh_ref, we_ref, be_ref,
                        wctx_ref, wemb_ref, whh0_ref, b0_ref,
                        wih_ref, whh_ref, br_ref,
                        wfc_ref, bfc_ref,
                        preds_ref, hout_ref, cout_ref,             # outputs
                        h_s, c_s):                                 # VMEM scratch (carried state)
    t = pl.program_id(0)
    T = pl.num_programs(0)
    L, N, H = h_s.shape
    S = enc_ref.shape[0]

    # ---- initialize carried state from the provided hidden/cell at the first step ----
    @pl.when(t == 0)
    def _init():
        h_s[...] = h0_ref[...]
        c_s[...] = c0_ref[...]

    enc = enc_ref[...]                                             # (S, N, 2H)  resident
    hid = h_s[...]                                                 # (L, N, H)   h_{t-1}
    cel = c_s[...]                                                 # (L, N, H)   c_{t-1}

    # ---- attention: energy Linear(3H->1) split algebraically (no (S*L,N,3H) replication) ----
    # energy_w = [w_h | w_e];  energy[r,n] = relu(w_h·hidden[r%L,n] + w_e·enc[r%S,n] + b)
    eh = jnp.sum(hid * wh_ref[...], axis=-1)                       # (L, N)
    ee = jnp.sum(enc * we_ref[...], axis=-1)                       # (S, N)
    # torch .repeat() row order: row r pairs hidden[r % L] with enc[r % S].  (A plain L x S
    # broadcast is NOT equivalent when gcd(L, S) != 1, so replicate the tiny 2-D energies.)
    eh_rep = jnp.concatenate([eh] * S, axis=0)                     # (S*L, N), row r = eh[r % L]
    ee_rep = jnp.concatenate([ee] * L, axis=0)                     # (S*L, N), row r = ee[r % S]
    energy = jnp.maximum(eh_rep + ee_rep + be_ref[...], 0.0)       # (S*L, N)
    # softmax over dim 0
    m = jnp.max(energy, axis=0, keepdims=True)
    p = jnp.exp(energy - m)
    att = p / jnp.sum(p, axis=0, keepdims=True)                    # (S*L, N)
    # ctx[n,:] = sum_r att[r,n]*enc[r%S,n,:] = sum_s (sum_a att[a*S+s,n]) * enc[s,n,:]
    att_s = att[0:S]
    for a in range(1, L):                                          # unrolled; L is tiny
        att_s = att_s + att[a * S:(a + 1) * S]                     # (S, N)
    ctx = jnp.sum(att_s[:, :, None] * enc, axis=0)                 # (N, 2H)

    # ---- embedding gather for this step's token ids (ids in SMEM, table resident in VMEM) ----
    # TODO(synk): nn.Dropout on the embedding modeled as eval-mode identity (deterministic fwd).
    rows = []
    for n in range(N):                                             # N is small & static
        rows.append(emb_ref[pl.ds(ids_ref[t, n], 1), :])           # (1, E)
    emb = jnp.concatenate(rows, axis=0)                            # (N, E)

    def lstm_cell(gates, c_prev):
        i = jax.nn.sigmoid(gates[:, 0:H])
        f = jax.nn.sigmoid(gates[:, H:2 * H])
        g = jnp.tanh(gates[:, 2 * H:3 * H])
        o = jax.nn.sigmoid(gates[:, 3 * H:4 * H])
        c_new = f * c_prev + i * g
        return o * jnp.tanh(c_new), c_new

    # ---- LSTM layer 0: split matmuls (no [ctx; emb; h] concat buffer / masked slice stores) ----
    gates = (jnp.dot(ctx, wctx_ref[...], preferred_element_type=jnp.float32)
             + jnp.dot(emb, wemb_ref[...], preferred_element_type=jnp.float32)
             + jnp.dot(hid[0], whh0_ref[...], preferred_element_type=jnp.float32)
             + b0_ref[...])                                        # (N, 4H)
    h_l, c_l = lstm_cell(gates, cel[0])
    h_s[0] = h_l
    c_s[0] = c_l

    # ---- LSTM layers 1..L-1 ----
    for l in range(1, L):
        gates = (jnp.dot(h_l, wih_ref[l - 1], preferred_element_type=jnp.float32)
                 + jnp.dot(hid[l], whh_ref[l - 1], preferred_element_type=jnp.float32)
                 + br_ref[l - 1])
        h_l, c_l = lstm_cell(gates, cel[l])
        h_s[l] = h_l
        c_s[l] = c_l

    # ---- output fc, vocab lane-padded to a multiple of 128 (unmasked store) ----
    preds_ref[0] = jnp.dot(h_l, wfc_ref[...],
                           preferred_element_type=jnp.float32) + bfc_ref[...]

    # ---- flush final hidden/cell state to HBM once ----
    @pl.when(t == T - 1)
    def _finalize():
        hout_ref[...] = h_s[...]
        cout_ref[...] = c_s[...]


# --------------------------------------------------------------------------------------------
# One-time weight preparation (hoisted out of the decode loop)
# --------------------------------------------------------------------------------------------
def prepare_params(params):
    f32 = jnp.float32
    H = params['w_hh'][0].shape[1]
    E = params['embedding'].shape[1]
    L = len(params['w_ih'])
    V = params['fc_w'].shape[0]

    ew = params['energy_w'].astype(f32)                            # (1, 3H)
    w_ih0_t = params['w_ih'][0].T.astype(f32)                      # (2H+E, 4H)
    prep = {
        'emb': params['embedding'].astype(f32),                    # (V, E)
        'wh': ew[:, :H].reshape(1, 1, H),
        'we': ew[:, H:].reshape(1, 1, 2 * H),
        'be': params['energy_b'].astype(f32).reshape(1, 1),
        # layer 0, split by input block: ctx rows, emb rows, recurrent weights
        'wctx': w_ih0_t[0:2 * H],                                  # (2H, 4H)
        'wemb': w_ih0_t[2 * H:2 * H + E],                          # (E, 4H)
        'whh0': params['w_hh'][0].T.astype(f32),                   # (H, 4H)
        'b0': (params['b_ih'][0] + params['b_hh'][0]).astype(f32).reshape(1, 4 * H),
    }
    if L > 1:
        prep['wih'] = jnp.stack([params['w_ih'][l].T for l in range(1, L)]).astype(f32)
        prep['whh'] = jnp.stack([params['w_hh'][l].T for l in range(1, L)]).astype(f32)
        prep['br'] = jnp.stack([params['b_ih'][l] + params['b_hh'][l]
                                for l in range(1, L)]).astype(f32).reshape(L - 1, 1, 4 * H)
    else:  # unused dummies so the kernel signature stays static
        prep['wih'] = jnp.zeros((1, H, 4 * H), f32)
        prep['whh'] = jnp.zeros((1, H, 4 * H), f32)
        prep['br'] = jnp.zeros((1, 1, 4 * H), f32)

    # fc: transpose once, lane-pad the vocab dim to a multiple of 128
    v_pad = ((V + 127) // 128) * 128
    wfc = params['fc_w'].T.astype(f32)                             # (H, V)
    bfc = params['fc_b'].astype(f32).reshape(1, V)
    if v_pad != V:
        wfc = jnp.pad(wfc, ((0, 0), (0, v_pad - V)))
        bfc = jnp.pad(bfc, ((0, 0), (0, v_pad - V)))
    prep['wfc'] = wfc
    prep['bfc'] = bfc
    return prep


# --------------------------------------------------------------------------------------------
# Fused T-step decode: ONE pallas_call, weights resident, h/c carried in VMEM scratch
# --------------------------------------------------------------------------------------------
def decoder_forward_seq(prep, x_ids_seq, encoder_states, hidden, cell):
    f32 = jnp.float32
    T, N = x_ids_seq.shape
    L, _, H = hidden.shape
    V = prep['emb'].shape[0]
    v_pad = prep['wfc'].shape[1]

    def resident(arr):
        # full-array block with a constant index_map -> DMA'd once, stays in VMEM all T steps
        if arr.ndim == 2:
            return pl.BlockSpec(arr.shape, lambda t, ids: (0, 0))
        return pl.BlockSpec(arr.shape, lambda t, ids: (0, 0, 0))

    resident_inputs = [
        prep['emb'], encoder_states.astype(f32), hidden.astype(f32), cell.astype(f32),
        prep['wh'], prep['we'], prep['be'],
        prep['wctx'], prep['wemb'], prep['whh0'], prep['b0'],
        prep['wih'], prep['whh'], prep['br'],
        prep['wfc'], prep['bfc'],
    ]

    grid_spec = pltpu.PrefetchScalarGridSpec(
        num_scalar_prefetch=1,                      # x_ids (T, N) int32 -> SMEM
        grid=(T,),
        in_specs=[resident(a) for a in resident_inputs],
        out_specs=(
            pl.BlockSpec((1, N, v_pad), lambda t, ids: (t, 0, 0)),   # per-step logits
            pl.BlockSpec((L, N, H), lambda t, ids: (0, 0, 0)),       # final hidden
            pl.BlockSpec((L, N, H), lambda t, ids: (0, 0, 0)),       # final cell
        ),
        scratch_shapes=[pltpu.VMEM((L, N, H), f32),                  # carried h state
                        pltpu.VMEM((L, N, H), f32)],                 # carried c state
    )

    preds_pad, h_out, c_out = pl.pallas_call(
        _decoder_seq_kernel,
        grid_spec=grid_spec,
        out_shape=(jax.ShapeDtypeStruct((T, N, v_pad), f32),
                   jax.ShapeDtypeStruct((L, N, H), f32),
                   jax.ShapeDtypeStruct((L, N, H), f32)),
        compiler_params=pltpu.CompilerParams(dimension_semantics=("arbitrary",)),
    )(x_ids_seq.astype(jnp.int32), *resident_inputs)

    preds = preds_pad[:, :, :V] if v_pad != V else preds_pad        # once per sequence
    return preds, h_out, c_out


# Single decode step == the original module's forward (T = 1)
def decoder_forward(prep, x_ids, encoder_states, hidden, cell):
    preds, h_out, c_out = decoder_forward_seq(prep, x_ids[None, :], encoder_states, hidden, cell)
    return preds[0], h_out, c_out


# --------------------------------------------------------------------------------------------
# Pure-JAX references (for correctness checks)
# --------------------------------------------------------------------------------------------
def decoder_forward_ref(params, x_ids, encoder_states, hidden, cell):
    L = hidden.shape[0]
    S = encoder_states.shape[0]
    emb = params['embedding'][x_ids][None]
    h_rep = jnp.tile(hidden, (S, 1, 1))
    enc_rep = jnp.tile(encoder_states, (L, 1, 1))
    hcat = jnp.concatenate([h_rep, enc_rep], axis=2)
    energy = jnp.maximum(hcat @ params['energy_w'].T + params['energy_b'], 0.0)
    att = jax.nn.softmax(energy, axis=0)
    ctx = jnp.einsum('snk,snl->knl', att, enc_rep)
    layer_in = jnp.concatenate([ctx, emb], axis=2)[0]
    hs, cs = [], []
    for l in range(L):
        gates = (layer_in @ params['w_ih'][l].T + params['b_ih'][l]
                 + hidden[l] @ params['w_hh'][l].T + params['b_hh'][l])
        i, f, g, o = jnp.split(gates, 4, axis=-1)
        c_new = jax.nn.sigmoid(f) * cell[l] + jax.nn.sigmoid(i) * jnp.tanh(g)
        h_new = jax.nn.sigmoid(o) * jnp.tanh(c_new)
        hs.append(h_new)
        cs.append(c_new)
        layer_in = h_new
    preds = layer_in @ params['fc_w'].T + params['fc_b']
    return preds, jnp.stack(hs), jnp.stack(cs)


def decoder_seq_ref(params, x_ids_seq, encoder_states, hidden, cell):
    preds_list = []
    for t in range(x_ids_seq.shape[0]):
        p, hidden, cell = decoder_forward_ref(params, x_ids_seq[t], encoder_states, hidden, cell)
        preds_list.append(p)
    return jnp.stack(preds_list), hidden, cell


# --------------------------------------------------------------------------------------------
# Deterministic parameter init
# --------------------------------------------------------------------------------------------
def init_params(key, embedding_size, hidden_size, output_size, num_layers):
    E, H, V, L = embedding_size, hidden_size, output_size, num_layers
    keys = iter(jax.random.split(key, 5 + 4 * L))
    scale = 1.0 / jnp.sqrt(jnp.float32(H))

    def u(k, shape):
        return jax.random.uniform(k, shape, jnp.float32, -scale, scale)

    params = {
        'embedding': jax.random.normal(next(keys), (V, E), jnp.float32),
        'energy_w': u(next(keys), (1, 3 * H)),   # nn.Linear(3H, 1)
        'energy_b': u(next(keys), (1,)),
        'fc_w': u(next(keys), (V, H)),           # nn.Linear(H, V)
        'fc_b': u(next(keys), (V,)),
        'w_ih': [], 'w_hh': [], 'b_ih': [], 'b_hh': [],
    }
    for l in range(L):
        in_size = 2 * H + E if l == 0 else H     # nn.LSTM(2H + E, H, num_layers)
        params['w_ih'].append(u(next(keys), (4 * H, in_size)))
        params['w_hh'].append(u(next(keys), (4 * H, H)))
        params['b_ih'].append(u(next(keys), (4 * H,)))
        params['b_hh'].append(u(next(keys), (4 * H,)))
    return params


if __name__ == "__main__":
    # embedding_size=16, hidden_size=32, output_size=64, num_layers=2,
    # bidirectional=True (encoder feature = 2*H), seq=8, batch=2, decode steps T=4
    E, H, V, L = 16, 32, 64, 2
    S, N, T = 8, 2, 4

    key = jax.random.PRNGKey(0)
    kp, kx, ke, kh, kc = jax.random.split(key, 5)
    params = init_params(kp, E, H, V, L)
    prep = prepare_params(params)                 # one-time weight prep (hoisted)

    x_seq = jax.random.randint(kx, (T, N), 0, V)
    encoder_states = jax.random.normal(ke, (S, N, 2 * H), jnp.float32)
    hidden = jax.random.normal(kh, (L, N, H), jnp.float32)
    cell = jax.random.normal(kc, (L, N, H), jnp.float32)

    # ---- single step (exactly the module's forward semantics) ----
    step = jax.jit(decoder_forward)
    p1, h1, c1 = step(prep, x_seq[0], encoder_states, hidden, cell)
    jax.block_until_ready((p1, h1, c1))
    p1_r, h1_r, c1_r = decoder_forward_ref(params, x_seq[0], encoder_states, hidden, cell)
    assert p1.shape == (N, V) and h1.shape == (L, N, H) and c1.shape == (L, N, H)
    assert jnp.allclose(p1, p1_r, atol=1e-4, rtol=1e-4)
    assert jnp.allclose(h1, h1_r, atol=1e-4, rtol=1e-4)
    assert jnp.allclose(c1, c1_r, atol=1e-4, rtol=1e-4)

    # ---- fused T-step decode (time loop inside ONE pallas_call) ----
    seq = jax.jit(decoder_forward_seq)
    pT, hT, cT = seq(prep, x_seq, encoder_states, hidden, cell)
    jax.block_until_ready((pT, hT, cT))
    pT_r, hT_r, cT_r = decoder_seq_ref(params, x_seq, encoder_states, hidden, cell)
    assert pT.shape == (T, N, V)
    assert jnp.allclose(pT, pT_r, atol=5e-4, rtol=5e-4)
    assert jnp.allclose(hT, hT_r, atol=5e-4, rtol=5e-4)
    assert jnp.allclose(cT, cT_r, atol=5e-4, rtol=5e-4)

    print("KERNEL_OK")
</pallas_src>

<mosaic_0001>
module attributes {stable_mosaic.version = 11 : i64} {
  func.func @_decoder_seq_kernel(%arg0: i32, %arg1: memref<1x2xi32, #tpu.memory_space<smem>>, %arg2: memref<64x16xf32, #tpu.memory_space<vmem>>, %arg3: memref<8x2x64xf32, #tpu.memory_space<vmem>>, %arg4: memref<2x2x32xf32, #tpu.memory_space<vmem>>, %arg5: memref<2x2x32xf32, #tpu.memory_space<vmem>>, %arg6: memref<1x1x32xf32, #tpu.memory_space<vmem>>, %arg7: memref<1x1x64xf32, #tpu.memory_space<vmem>>, %arg8: memref<1x1xf32, #tpu.memory_space<vmem>>, %arg9: memref<64x128xf32, #tpu.memory_space<vmem>>, %arg10: memref<16x128xf32, #tpu.memory_space<vmem>>, %arg11: memref<32x128xf32, #tpu.memory_space<vmem>>, %arg12: memref<1x128xf32, #tpu.memory_space<vmem>>, %arg13: memref<1x32x128xf32, #tpu.memory_space<vmem>>, %arg14: memref<1x32x128xf32, #tpu.memory_space<vmem>>, %arg15: memref<1x1x128xf32, #tpu.memory_space<vmem>>, %arg16: memref<32x128xf32, #tpu.memory_space<vmem>>, %arg17: memref<1x128xf32, #tpu.memory_space<vmem>>, %arg18: memref<1x2x128xf32, #tpu.memory_space<vmem>>, %arg19: memref<2x2x32xf32, #tpu.memory_space<vmem>>, %arg20: memref<2x2x32xf32, #tpu.memory_space<vmem>>, %arg21: memref<2x2x32xf32, #tpu.memory_space<vmem>>, %arg22: memref<2x2x32xf32, #tpu.memory_space<vmem>>) attributes {dimension_semantics = [#tpu.dimension_semantics<arbitrary>], iteration_bounds = array<i64: 1>, scalar_prefetch = 1 : i64, scratch_operands = 2 : i64, tpu.core_type = #tpu.core_type<tc>, window_params = [{pipeline_mode = #tpu.pipeline_mode<synchronous>, transform_indices = @transform_0, window_bounds = array<i64: 64, 16>}, {pipeline_mode = #tpu.pipeline_mode<synchronous>, transform_indices = @transform_1, window_bounds = array<i64: 8, 2, 64>}, {pipeline_mode = #tpu.pipeline_mode<synchronous>, transform_indices = @transform_2, window_bounds = array<i64: 2, 2, 32>}, {pipeline_mode = #tpu.pipeline_mode<synchronous>, transform_indices = @transform_3, window_bounds = array<i64: 2, 2, 32>}, {pipeline_mode = #tpu.pipeline_mode<synchronous>, transform_indices = @transform_4, window_bounds = array<i64: 1, 1, 32>}, {pipeline_mode = #tpu.pipeline_mode<synchronous>, transform_indices = @transform_5, window_bounds = array<i64: 1, 1, 64>}, {pipeline_mode = #tpu.pipeline_mode<synchronous>, transform_indices = @transform_6, window_bounds = array<i64: 1, 1>}, {pipeline_mode = #tpu.pipeline_mode<synchronous>, transform_indices = @transform_7, window_bounds = array<i64: 64, 128>}, {pipeline_mode = #tpu.pipeline_mode<synchronous>, transform_indices = @transform_8, window_bounds = array<i64: 16, 128>}, {pipeline_mode = #tpu.pipeline_mode<synchronous>, transform_indices = @transform_9, window_bounds = array<i64: 32, 128>}, {pipeline_mode = #tpu.pipeline_mode<synchronous>, transform_indices = @transform_10, window_bounds = array<i64: 1, 128>}, {pipeline_mode = #tpu.pipeline_mode<synchronous>, transform_indices = @transform_11, window_bounds = array<i64: 1, 32, 128>}, {pipeline_mode = #tpu.pipeline_mode<synchronous>, transform_indices = @transform_12, window_bounds = array<i64: 1, 32, 128>}, {pipeline_mode = #tpu.pipeline_mode<synchronous>, transform_indices = @transform_13, window_bounds = array<i64: 1, 1, 128>}, {pipeline_mode = #tpu.pipeline_mode<synchronous>, transform_indices = @transform_14, window_bounds = array<i64: 32, 128>}, {pipeline_mode = #tpu.pipeline_mode<synchronous>, transform_indices = @transform_15, window_bounds = array<i64: 1, 128>}, {transform_indices = @transform_16, window_bounds = array<i64: 1, 2, 128>}, {pipeline_mode = #tpu.pipeline_mode<synchronous>, transform_indices = @transform_17, window_bounds = array<i64: 2, 2, 32>}, {pipeline_mode = #tpu.pipeline_mode<synchronous>, transform_indices = @transform_18, window_bounds = array<i64: 2, 2, 32>}]} {
    %c0_i32 = arith.constant 0 : i32
    %0 = arith.cmpi eq, %arg0, %c0_i32 : i32
    %1 = arith.extui %0 : i1 to i32
    %c0_i32_0 = arith.constant 0 : i32
    %2 = arith.cmpi ne, %1, %c0_i32_0 : i32
    scf.if %2 {
      %c0_75 = arith.constant 0 : index
      %c0_76 = arith.constant 0 : index
      %c0_77 = arith.constant 0 : index
      %150 = vector.load %arg4[%c0_75, %c0_76, %c0_77] : memref<2x2x32xf32, #tpu.memory_space<vmem>>, vector<2x2x32xf32>
      %c0_78 = arith.constant 0 : index
      %c0_79 = arith.constant 0 : index
      %c0_80 = arith.constant 0 : index
      %151 = vector.load %arg21[%c0_78, %c0_79, %c0_80] : memref<2x2x32xf32, #tpu.memory_space<vmem>>, vector<2x2x32xf32>
      tpu.vector_store %arg21[%c0_78, %c0_79, %c0_80], %150 {strides = array<i32>} : memref<2x2x32xf32, #tpu.memory_space<vmem>>, vector<2x2x32xf32>,
      %c0_81 = arith.constant 0 : index
      %c0_82 = arith.constant 0 : index
      %c0_83 = arith.constant 0 : index
      %152 = vector.load %arg5[%c0_81, %c0_82, %c0_83] : memref<2x2x32xf32, #tpu.memory_space<vmem>>, vector<2x2x32xf32>
      %c0_84 = arith.constant 0 : index
      %c0_85 = arith.constant 0 : index
      %c0_86 = arith.constant 0 : index
      %153 = vector.load %arg22[%c0_84, %c0_85, %c0_86] : memref<2x2x32xf32, #tpu.memory_space<vmem>>, vector<2x2x32xf32>
      tpu.vector_store %arg22[%c0_84, %c0_85, %c0_86], %152 {strides = array<i32>} : memref<2x2x32xf32, #tpu.memory_space<vmem>>, vector<2x2x32xf32>,
    } else {
    }
    %c0 = arith.constant 0 : index
    %c0_1 = arith.constant 0 : index
    %c0_2 = arith.constant 0 : index
    %3 = vector.load %arg3[%c0, %c0_1, %c0_2] : memref<8x2x64xf32, #tpu.memory_space<vmem>>, vector<8x2x64xf32>
    %c0_3 = arith.constant 0 : index
    %c0_4 = arith.constant 0 : index
    %c0_5 = arith.constant 0 : index
    %4 = vector.load %arg21[%c0_3, %c0_4, %c0_5] : memref<2x2x32xf32, #tpu.memory_space<vmem>>, vector<2x2x32xf32>
    %c0_6 = arith.constant 0 : index
    %c0_7 = arith.constant 0 : index
    %c0_8 = arith.constant 0 : index
    %5 = vector.load %arg22[%c0_6, %c0_7, %c0_8] : memref<2x2x32xf32, #tpu.memory_space<vmem>>, vector<2x2x32xf32>
    %c0_9 = arith.constant 0 : index
    %c0_10 = arith.constant 0 : index
    %c0_11 = arith.constant 0 : index
    %6 = vector.load %arg6[%c0_9, %c0_10, %c0_11] : memref<1x1x32xf32, #tpu.memory_space<vmem>>, vector<1x1x32xf32>
    %7 = vector.broadcast %6 : vector<1x1x32xf32> to vector<2x2x32xf32>
    %8 = arith.mulf %4, %7 : vector<2x2x32xf32>
    %cst = arith.constant dense<0.000000e+00> : vector<2x2xf32>
    %9 = vector.multi_reduction <add>, %8, %cst [2] : vector<2x2x32xf32> to vector<2x2xf32>
    %c0_12 = arith.constant 0 : index
    %c0_13 = arith.constant 0 : index
    %c0_14 = arith.constant 0 : index
    %10 = vector.load %arg7[%c0_12, %c0_13, %c0_14] : memref<1x1x64xf32, #tpu.memory_space<vmem>>, vector<1x1x64xf32>
    %11 = vector.broadcast %10 : vector<1x1x64xf32> to vector<8x2x64xf32>
    %12 = arith.mulf %3, %11 : vector<8x2x64xf32>
    %cst_15 = arith.constant dense<0.000000e+00> : vector<8x2xf32>
    %13 = vector.multi_reduction <add>, %12, %cst_15 [2] : vector<8x2x64xf32> to vector<8x2xf32>
    %14 = tpu.concatenate %9, %9, %9, %9, %9, %9, %9, %9 in 0 : vector<2x2xf32>, vector<2x2xf32>, vector<2x2xf32>, vector<2x2xf32>, vector<2x2xf32>, vector<2x2xf32>, vector<2x2xf32>, vector<2x2xf32> -> vector<16x2xf32>
    %15 = tpu.concatenate %13, %13 in 0 : vector<8x2xf32>, vector<8x2xf32> -> vector<16x2xf32>
    %16 = arith.addf %14, %15 : vector<16x2xf32>
    %c0_16 = arith.constant 0 : index
    %c0_17 = arith.constant 0 : index
    %17 = vector.load %arg8[%c0_16, %c0_17] : memref<1x1xf32, #tpu.memory_space<vmem>>, vector<1x1xf32>
    %18 = vector.broadcast %17 : vector<1x1xf32> to vector<16x2xf32>
    %19 = arith.addf %16, %18 : vector<16x2xf32>
    %cst_18 = arith.constant 0.000000e+00 : f32
    %20 = vector.broadcast %cst_18 : f32 to vector<16x2xf32>
    %21 = arith.maximumf %19, %20 : vector<16x2xf32>
    %cst_19 = arith.constant dense<0xFF800000> : vector<2xf32>
    %22 = vector.multi_reduction <maximumf>, %21, %cst_19 [0] : vector<16x2xf32> to vector<2xf32>
    %23 = vector.shape_cast %22 : vector<2xf32> to vector<1x2xf32>
    %24 = vector.broadcast %23 : vector<1x2xf32> to vector<16x2xf32>
    %25 = arith.subf %21, %24 : vector<16x2xf32>
    %26 = math.exp %25 : vector<16x2xf32>
    %cst_20 = arith.constant dense<0.000000e+00> : vector<2xf32>
    %27 = vector.multi_reduction <add>, %26, %cst_20 [0] : vector<16x2xf32> to vector<2xf32>
    %28 = vector.shape_cast %27 : vector<2xf32> to vector<1x2xf32>
    %29 = vector.broadcast %28 : vector<1x2xf32> to vector<16x2xf32>
    %30 = arith.divf %26, %29 : vector<16x2xf32>
    %31 = vector.extract_strided_slice %30 {offsets = [0, 0], sizes = [8, 2], strides = [1, 1]} : vector<16x2xf32> to vector<8x2xf32>
    %32 = vector.extract_strided_slice %30 {offsets = [8, 0], sizes = [8, 2], strides = [1, 1]} : vector<16x2xf32> to vector<8x2xf32>
    %33 = arith.addf %31, %32 : vector<8x2xf32>
    %34 = vector.shape_cast %33 : vector<8x2xf32> to vector<8x2x1xf32>
    %35 = vector.broadcast %34 : vector<8x2x1xf32> to vector<8x2x64xf32>
    %36 = arith.mulf %35, %3 : vector<8x2x64xf32>
    %cst_21 = arith.constant dense<0.000000e+00> : vector<2x64xf32>
    %37 = vector.multi_reduction <add>, %36, %cst_21 [0] : vector<8x2x64xf32> to vector<2x64xf32>
    %38 = arith.index_cast %arg0 : i32 to index
    %c0_22 = arith.constant 0 : index
    %39 = memref.load %arg1[%38, %c0_22] : memref<1x2xi32, #tpu.memory_space<smem>>
    %40 = arith.index_cast %39 : i32 to index
    %c0_23 = arith.constant 0 : index
    %41 = vector.load %arg2[%40, %c0_23] : memref<64x16xf32, #tpu.memory_space<vmem>>, vector<1x16xf32>
    %42 = arith.index_cast %arg0 : i32 to index
    %c1 = arith.constant 1 : index
    %43 = memref.load %arg1[%42, %c1] : memref<1x2xi32, #tpu.memory_space<smem>>
    %44 = arith.index_cast %43 : i32 to index
    %c0_24 = arith.constant 0 : index
    %45 = vector.load %arg2[%44, %c0_24] : memref<64x16xf32, #tpu.memory_space<vmem>>, vector<1x16xf32>
    %46 = tpu.concatenate %41, %45 in 0 : vector<1x16xf32>, vector<1x16xf32> -> vector<2x16xf32>
    %c0_25 = arith.constant 0 : index
    %c0_26 = arith.constant 0 : index
    %47 = vector.load %arg9[%c0_25, %c0_26] : memref<64x128xf32, #tpu.memory_space<vmem>>, vector<64x128xf32>
    %cst_27 = arith.constant dense<0.000000e+00> : vector<2x128xf32>
    %48 = tpu.matmul %37, %47, %cst_27 {dimension_numbers = #tpu.dot_dimension_numbers<[1], [0], [0], [1], [0, 0, 1, 1], [], []>} : vector<2x64xf32>, vector<64x128xf32>, vector<2x128xf32> -> vector<2x128xf32>
    %c0_28 = arith.constant 0 : index
    %c0_29 = arith.constant 0 : index
    %49 = vector.load %arg10[%c0_28, %c0_29] : memref<16x128xf32, #tpu.memory_space<vmem>>, vector<16x128xf32>
    %cst_30 = arith.constant dense<0.000000e+00> : vector<2x128xf32>
    %50 = tpu.matmul %46, %49, %cst_30 {dimension_numbers = #tpu.dot_dimension_numbers<[1], [0], [0], [1], [0, 0, 1, 1], [], []>} : vector<2x16xf32>, vector<16x128xf32>, vector<2x128xf32> -> vector<2x128xf32>
    %51 = arith.addf %48, %50 : vector<2x128xf32>
    %52 = vector.extract_strided_slice %4 {offsets = [0, 0, 0], sizes = [1, 2, 32], strides = [1, 1, 1]} : vector<2x2x32xf32> to vector<1x2x32xf32>
    %53 = vector.shape_cast %52 : vector<1x2x32xf32> to vector<2x32xf32>
    %c0_31 = arith.constant 0 : index
    %c0_32 = arith.constant 0 : index
    %54 = vector.load %arg11[%c0_31, %c0_32] : memref<32x128xf32, #tpu.memory_space<vmem>>, vector<32x128xf32>
    %cst_33 = arith.constant dense<0.000000e+00> : vector<2x128xf32>
    %55 = tpu.matmul %53, %54, %cst_33 {dimension_numbers = #tpu.dot_dimension_numbers<[1], [0], [0], [1], [0, 0, 1, 1], [], []>} : vector<2x32xf32>, vector<32x128xf32>, vector<2x128xf32> -> vector<2x128xf32>
    %56 = arith.addf %51, %55 : vector<2x128xf32>
    %c0_34 = arith.constant 0 : index
    %c0_35 = arith.constant 0 : index
    %57 = vector.load %arg12[%c0_34, %c0_35] : memref<1x128xf32, #tpu.memory_space<vmem>>, vector<1x128xf32>
    %58 = vector.broadcast %57 : vector<1x128xf32> to vector<2x128xf32>
    %59 = arith.addf %56, %58 : vector<2x128xf32>
    %60 = vector.extract_strided_slice %5 {offsets = [0, 0, 0], sizes = [1, 2, 32], strides = [1, 1, 1]} : vector<2x2x32xf32> to vector<1x2x32xf32>
    %61 = vector.shape_cast %60 : vector<1x2x32xf32> to vector<2x32xf32>
    %62 = vector.extract_strided_slice %59 {offsets = [0, 0], sizes = [2, 32], strides = [1, 1]} : vector<2x128xf32> to vector<2x32xf32>
    %63 = arith.negf %62 : vector<2x32xf32>
    %64 = math.exp %63 : vector<2x32xf32>
    %cst_36 = arith.constant 1.000000e+00 : f32
    %65 = vector.broadcast %cst_36 : f32 to vector<2x32xf32>
    %66 = arith.addf %65, %64 : vector<2x32xf32>
    %67 = arith.divf %65, %66 : vector<2x32xf32>
    %68 = vector.extract_strided_slice %59 {offsets = [0, 32], sizes = [2, 32], strides = [1, 1]} : vector<2x128xf32> to vector<2x32xf32>
    %69 = arith.negf %68 : vector<2x32xf32>
    %70 = math.exp %69 : vector<2x32xf32>
    %cst_37 = arith.constant 1.000000e+00 : f32
    %71 = vector.broadcast %cst_37 : f32 to vector<2x32xf32>
    %72 = arith.addf %71, %70 : vector<2x32xf32>
    %73 = arith.divf %71, %72 : vector<2x32xf32>
    %74 = vector.extract_strided_slice %59 {offsets = [0, 64], sizes = [2, 32], strides = [1, 1]} : vector<2x128xf32> to vector<2x32xf32>
    %75 = math.tanh %74 : vector<2x32xf32>
    %76 = vector.extract_strided_slice %59 {offsets = [0, 96], sizes = [2, 32], strides = [1, 1]} : vector<2x128xf32> to vector<2x32xf32>
    %77 = arith.negf %76 : vector<2x32xf32>
    %78 = math.exp %77 : vector<2x32xf32>
    %cst_38 = arith.constant 1.000000e+00 : f32
    %79 = vector.broadcast %cst_38 : f32 to vector<2x32xf32>
    %80 = arith.addf %79, %78 : vector<2x32xf32>
    %81 = arith.divf %79, %80 : vector<2x32xf32>
    %82 = arith.mulf %73, %61 : vector<2x32xf32>
    %83 = arith.mulf %67, %75 : vector<2x32xf32>
    %84 = arith.addf %82, %83 : vector<2x32xf32>
    %85 = math.tanh %84 : vector<2x32xf32>
    %86 = arith.mulf %81, %85 : vector<2x32xf32>
    %c0_39 = arith.constant 0 : index
    %c0_40 = arith.constant 0 : index
    %c0_41 = arith.constant 0 : index
    %87 = vector.load %arg21[%c0_39, %c0_40, %c0_41] : memref<2x2x32xf32, #tpu.memory_space<vmem>>, vector<1x2x32xf32>
    %88 = vector.shape_cast %87 : vector<1x2x32xf32> to vector<2x32xf32>
    %89 = vector.shape_cast %86 : vector<2x32xf32> to vector<1x2x32xf32>
    tpu.vector_store %arg21[%c0_39, %c0_40, %c0_41], %89 {strides = array<i32>} : memref<2x2x32xf32, #tpu.memory_space<vmem>>, vector<1x2x32xf32>,
    %c0_42 = arith.constant 0 : index
    %c0_43 = arith.constant 0 : index
    %c0_44 = arith.constant 0 : index
    %90 = vector.load %arg22[%c0_42, %c0_43, %c0_44] : memref<2x2x32xf32, #tpu.memory_space<vmem>>, vector<1x2x32xf32>
    %91 = vector.shape_cast %90 : vector<1x2x32xf32> to vector<2x32xf32>
    %92 = vector.shape_cast %84 : vector<2x32xf32> to vector<1x2x32xf32>
    tpu.vector_store %arg22[%c0_42, %c0_43, %c0_44], %92 {strides = array<i32>} : memref<2x2x32xf32, #tpu.memory_space<vmem>>, vector<1x2x32xf32>,
    %c0_45 = arith.constant 0 : index
    %c0_46 = arith.constant 0 : index
    %c0_47 = arith.constant 0 : index
    %93 = vector.load %arg13[%c0_45, %c0_46, %c0_47] : memref<1x32x128xf32, #tpu.memory_space<vmem>>, vector<1x32x128xf32>
    %94 = vector.shape_cast %93 : vector<1x32x128xf32> to vector<32x128xf32>
    %cst_48 = arith.constant dense<0.000000e+00> : vector<2x128xf32>
    %95 = tpu.matmul %86, %94, %cst_48 {dimension_numbers = #tpu.dot_dimension_numbers<[1], [0], [0], [1], [0, 0, 1, 1], [], []>} : vector<2x32xf32>, vector<32x128xf32>, vector<2x128xf32> -> vector<2x128xf32>
    %96 = vector.extract_strided_slice %4 {offsets = [1, 0, 0], sizes = [1, 2, 32], strides = [1, 1, 1]} : vector<2x2x32xf32> to vector<1x2x32xf32>
    %97 = vector.shape_cast %96 : vector<1x2x32xf32> to vector<2x32xf32>
    %c0_49 = arith.constant 0 : index
    %c0_50 = arith.constant 0 : index
    %c0_51 = arith.constant 0 : index
    %98 = vector.load %arg14[%c0_49, %c0_50, %c0_51] : memref<1x32x128xf32, #tpu.memory_space<vmem>>, vector<1x32x128xf32>
    %99 = vector.shape_cast %98 : vector<1x32x128xf32> to vector<32x128xf32>
    %cst_52 = arith.constant dense<0.000000e+00> : vector<2x128xf32>
    %100 = tpu.matmul %97, %99, %cst_52 {dimension_numbers = #tpu.dot_dimension_numbers<[1], [0], [0], [1], [0, 0, 1, 1], [], []>} : vector<2x32xf32>, vector<32x128xf32>, vector<2x128xf32> -> vector<2x128xf32>
    %101 = arith.addf %95, %100 : vector<2x128xf32>
    %c0_53 = arith.constant 0 : index
    %c0_54 = arith.constant 0 : index
    %c0_55 = arith.constant 0 : index
    %102 = vector.load %arg15[%c0_53, %c0_54, %c0_55] : memref<1x1x128xf32, #tpu.memory_space<vmem>>, vector<1x1x128xf32>
    %103 = vector.shape_cast %102 : vector<1x1x128xf32> to vector<1x128xf32>
    %104 = vector.broadcast %103 : vector<1x128xf32> to vector<2x128xf32>
    %105 = arith.addf %101, %104 : vector<2x128xf32>
    %106 = vector.extract_strided_slice %5 {offsets = [1, 0, 0], sizes = [1, 2, 32], strides = [1, 1, 1]} : vector<2x2x32xf32> to vector<1x2x32xf32>
    %107 = vector.shape_cast %106 : vector<1x2x32xf32> to vector<2x32xf32>
    %108 = vector.extract_strided_slice %105 {offsets = [0, 0], sizes = [2, 32], strides = [1, 1]} : vector<2x128xf32> to vector<2x32xf32>
    %109 = arith.negf %108 : vector<2x32xf32>
    %110 = math.exp %109 : vector<2x32xf32>
    %cst_56 = arith.constant 1.000000e+00 : f32
    %111 = vector.broadcast %cst_56 : f32 to vector<2x32xf32>
    %112 = arith.addf %111, %110 : vector<2x32xf32>
    %113 = arith.divf %111, %112 : vector<2x32xf32>
    %114 = vector.extract_strided_slice %105 {offsets = [0, 32], sizes = [2, 32], strides = [1, 1]} : vector<2x128xf32> to vector<2x32xf32>
    %115 = arith.negf %114 : vector<2x32xf32>
    %116 = math.exp %115 : vector<2x32xf32>
    %cst_57 = arith.constant 1.000000e+00 : f32
    %117 = vector.broadcast %cst_57 : f32 to vector<2x32xf32>
    %118 = arith.addf %117, %116 : vector<2x32xf32>
    %119 = arith.divf %117, %118 : vector<2x32xf32>
    %120 = vector.extract_strided_slice %105 {offsets = [0, 64], sizes = [2, 32], strides = [1, 1]} : vector<2x128xf32> to vector<2x32xf32>
    %121 = math.tanh %120 : vector<2x32xf32>
    %122 = vector.extract_strided_slice %105 {offsets = [0, 96], sizes = [2, 32], strides = [1, 1]} : vector<2x128xf32> to vector<2x32xf32>
    %123 = arith.negf %122 : vector<2x32xf32>
    %124 = math.exp %123 : vector<2x32xf32>
    %cst_58 = arith.constant 1.000000e+00 : f32
    %125 = vector.broadcast %cst_58 : f32 to vector<2x32xf32>
    %126 = arith.addf %125, %124 : vector<2x32xf32>
    %127 = arith.divf %125, %126 : vector<2x32xf32>
    %128 = arith.mulf %119, %107 : vector<2x32xf32>
    %129 = arith.mulf %113, %121 : vector<2x32xf32>
    %130 = arith.addf %128, %129 : vector<2x32xf32>
    %131 = math.tanh %130 : vector<2x32xf32>
    %132 = arith.mulf %127, %131 : vector<2x32xf32>
    %c1_59 = arith.constant 1 : index
    %c0_60 = arith.constant 0 : index
    %c0_61 = arith.constant 0 : index
    %133 = vector.load %arg21[%c1_59, %c0_60, %c0_61] : memref<2x2x32xf32, #tpu.memory_space<vmem>>, vector<1x2x32xf32>
    %134 = vector.shape_cast %133 : vector<1x2x32xf32> to vector<2x32xf32>
    %135 = vector.shape_cast %132 : vector<2x32xf32> to vector<1x2x32xf32>
    tpu.vector_store %arg21[%c1_59, %c0_60, %c0_61], %135 {strides = array<i32>} : memref<2x2x32xf32, #tpu.memory_space<vmem>>, vector<1x2x32xf32>,
    %c1_62 = arith.constant 1 : index
    %c0_63 = arith.constant 0 : index
    %c0_64 = arith.constant 0 : index
    %136 = vector.load %arg22[%c1_62, %c0_63, %c0_64] : memref<2x2x32xf32, #tpu.memory_space<vmem>>, vector<1x2x32xf32>
    %137 = vector.shape_cast %136 : vector<1x2x32xf32> to vector<2x32xf32>
    %138 = vector.shape_cast %130 : vector<2x32xf32> to vector<1x2x32xf32>
    tpu.vector_store %arg22[%c1_62, %c0_63, %c0_64], %138 {strides = array<i32>} : memref<2x2x32xf32, #tpu.memory_space<vmem>>, vector<1x2x32xf32>,
    %c0_65 = arith.constant 0 : index
    %c0_66 = arith.constant 0 : index
    %139 = vector.load %arg16[%c0_65, %c0_66] : memref<32x128xf32, #tpu.memory_space<vmem>>, vector<32x128xf32>
    %cst_67 = arith.constant dense<0.000000e+00> : vector<2x128xf32>
    %140 = tpu.matmul %132, %139, %cst_67 {dimension_numbers = #tpu.dot_dimension_numbers<[1], [0], [0], [1], [0, 0, 1, 1], [], []>} : vector<2x32xf32>, vector<32x128xf32>, vector<2x128xf32> -> vector<2x128xf32>
    %c0_68 = arith.constant 0 : index
    %c0_69 = arith.constant 0 : index
    %141 = vector.load %arg17[%c0_68, %c0_69] : memref<1x128xf32, #tpu.memory_space<vmem>>, vector<1x128xf32>
    %142 = vector.broadcast %141 : vector<1x128xf32> to vector<2x128xf32>
    %143 = arith.addf %140, %142 : vector<2x128xf32>
    %c0_70 = arith.constant 0 : index
    %c0_71 = arith.constant 0 : index
    %c0_72 = arith.constant 0 : index
    %144 = vector.load %arg18[%c0_70, %c0_71, %c0_72] : memref<1x2x128xf32, #tpu.memory_space<vmem>>, vector<1x2x128xf32>
    %145 = vector.shape_cast %144 : vector<1x2x128xf32> to vector<2x128xf32>
    %146 = vector.shape_cast %143 : vector<2x128xf32> to vector<1x2x128xf32>
    tpu.vector_store %arg18[%c0_70, %c0_71, %c0_72], %146 {strides = array<i32>} : memref<1x2x128xf32, #tpu.memory_space<vmem>>, vector<1x2x128xf32>,
    %c0_i32_73 = arith.constant 0 : i32
    %147 = arith.cmpi eq, %arg0, %c0_i32_73 : i32
    %148 = arith.extui %147 : i1 to i32
    %c0_i32_74 = arith.constant 0 : i32
    %149 = arith.cmpi ne, %148, %c0_i32_74 : i32
    scf.if %149 {
      %c0_75 = arith.constant 0 : index
      %c0_76 = arith.constant 0 : index
      %c0_77 = arith.constant 0 : index
      %150 = vector.load %arg21[%c0_75, %c0_76, %c0_77] : memref<2x2x32xf32, #tpu.memory_space<vmem>>, vector<2x2x32xf32>
      %c0_78 = arith.constant 0 : index
      %c0_79 = arith.constant 0 : index
      %c0_80 = arith.constant 0 : index
      %151 = vector.load %arg19[%c0_78, %c0_79, %c0_80] : memref<2x2x32xf32, #tpu.memory_space<vmem>>, vector<2x2x32xf32>
      tpu.vector_store %arg19[%c0_78, %c0_79, %c0_80], %150 {strides = array<i32>} : memref<2x2x32xf32, #tpu.memory_space<vmem>>, vector<2x2x32xf32>,
      %c0_81 = arith.constant 0 : index
      %c0_82 = arith.constant 0 : index
      %c0_83 = arith.constant 0 : index
      %152 = vector.load %arg22[%c0_81, %c0_82, %c0_83] : memref<2x2x32xf32, #tpu.memory_space<vmem>>, vector<2x2x32xf32>
      %c0_84 = arith.constant 0 : index
      %c0_85 = arith.constant 0 : index
      %c0_86 = arith.constant 0 : index
      %153 = vector.load %arg20[%c0_84, %c0_85, %c0_86] : memref<2x2x32xf32, #tpu.memory_space<vmem>>, vector<2x2x32xf32>
      tpu.vector_store %arg20[%c0_84, %c0_85, %c0_86], %152 {strides = array<i32>} : memref<2x2x32xf32, #tpu.memory_space<vmem>>, vector<2x2x32xf32>,
    } else {
    }
    return
  }
  func.func @transform_0(%arg0: i32, %arg1: memref<1x2xi32, #tpu.memory_space<smem>>) -> (i32, i32) {
    %c0_i32 = arith.constant 0 : i32
    %c0_i32_0 = arith.constant 0 : i32
    %c0_i32_1 = arith.constant 0 : i32
    return %c0_i32, %c0_i32_0 : i32, i32
  }
  func.func @transform_1(%arg0: i32, %arg1: memref<1x2xi32, #tpu.memory_space<smem>>) -> (i32, i32, i32) {
    %c0_i32 = arith.constant 0 : i32
    %c0_i32_0 = arith.constant 0 : i32
    %c0_i32_1 = arith.constant 0 : i32
    %c0_i32_2 = arith.constant 0 : i32
    return %c0_i32, %c0_i32_0, %c0_i32_1 : i32, i32, i32
  }
  func.func @transform_2(%arg0: i32, %arg1: memref<1x2xi32, #tpu.memory_space<smem>>) -> (i32, i32, i32) {
    %c0_i32 = arith.constant 0 : i32
    %c0_i32_0 = arith.constant 0 : i32
    %c0_i32_1 = arith.constant 0 : i32
    %c0_i32_2 = arith.constant 0 : i32
    return %c0_i32, %c0_i32_0, %c0_i32_1 : i32, i32, i32
  }
  func.func @transform_3(%arg0: i32, %arg1: memref<1x2xi32, #tpu.memory_space<smem>>) -> (i32, i32, i32) {
    %c0_i32 = arith.constant 0 : i32
    %c0_i32_0 = arith.constant 0 : i32
    %c0_i32_1 = arith.constant 0 : i32
    %c0_i32_2 = arith.constant 0 : i32
    return %c0_i32, %c0_i32_0, %c0_i32_1 : i32, i32, i32
  }
  func.func @transform_4(%arg0: i32, %arg1: memref<1x2xi32, #tpu.memory_space<smem>>) -> (i32, i32, i32) {
    %c0_i32 = arith.constant 0 : i32
    %c0_i32_0 = arith.constant 0 : i32
    %c0_i32_1 = arith.constant 0 : i32
    %c0_i32_2 = arith.constant 0 : i32
    return %c0_i32, %c0_i32_0, %c0_i32_1 : i32, i32, i32
  }
  func.func @transform_5(%arg0: i32, %arg1: memref<1x2xi32, #tpu.memory_space<smem>>) -> (i32, i32, i32) {
    %c0_i32 = arith.constant 0 : i32
    %c0_i32_0 = arith.constant 0 : i32
    %c0_i32_1 = arith.constant 0 : i32
    %c0_i32_2 = arith.constant 0 : i32
    return %c0_i32, %c0_i32_0, %c0_i32_1 : i32, i32, i32
  }
  func.func @transform_6(%arg0: i32, %arg1: memref<1x2xi32, #tpu.memory_space<smem>>) -> (i32, i32) {
    %c0_i32 = arith.constant 0 : i32
    %c0_i32_0 = arith.constant 0 : i32
    %c0_i32_1 = arith.constant 0 : i32
    return %c0_i32, %c0_i32_0 : i32, i32
  }
  func.func @transform_7(%arg0: i32, %arg1: memref<1x2xi32, #tpu.memory_space<smem>>) -> (i32, i32) {
    %c0_i32 = arith.constant 0 : i32
    %c0_i32_0 = arith.constant 0 : i32
    %c0_i32_1 = arith.constant 0 : i32
    return %c0_i32, %c0_i32_0 : i32, i32
  }
  func.func @transform_8(%arg0: i32, %arg1: memref<1x2xi32, #tpu.memory_space<smem>>) -> (i32, i32) {
    %c0_i32 = arith.constant 0 : i32
    %c0_i32_0 = arith.constant 0 : i32
    %c0_i32_1 = arith.constant 0 : i32
    return %c0_i32, %c0_i32_0 : i32, i32
  }
  func.func @transform_9(%arg0: i32, %arg1: memref<1x2xi32, #tpu.memory_space<smem>>) -> (i32, i32) {
    %c0_i32 = arith.constant 0 : i32
    %c0_i32_0 = arith.constant 0 : i32
    %c0_i32_1 = arith.constant 0 : i32
    return %c0_i32, %c0_i32_0 : i32, i32
  }
  func.func @transform_10(%arg0: i32, %arg1: memref<1x2xi32, #tpu.memory_space<smem>>) -> (i32, i32) {
    %c0_i32 = arith.constant 0 : i32
    %c0_i32_0 = arith.constant 0 : i32
    %c0_i32_1 = arith.constant 0 : i32
    return %c0_i32, %c0_i32_0 : i32, i32
  }
  func.func @transform_11(%arg0: i32, %arg1: memref<1x2xi32, #tpu.memory_space<smem>>) -> (i32, i32, i32) {
    %c0_i32 = arith.constant 0 : i32
    %c0_i32_0 = arith.constant 0 : i32
    %c0_i32_1 = arith.constant 0 : i32
    %c0_i32_2 = arith.constant 0 : i32
    return %c0_i32, %c0_i32_0, %c0_i32_1 : i32, i32, i32
  }
  func.func @transform_12(%arg0: i32, %arg1: memref<1x2xi32, #tpu.memory_space<smem>>) -> (i32, i32, i32) {
    %c0_i32 = arith.constant 0 : i32
    %c0_i32_0 = arith.constant 0 : i32
    %c0_i32_1 = arith.constant 0 : i32
    %c0_i32_2 = arith.constant 0 : i32
    return %c0_i32, %c0_i32_0, %c0_i32_1 : i32, i32, i32
  }
  func.func @transform_13(%arg0: i32, %arg1: memref<1x2xi32, #tpu.memory_space<smem>>) -> (i32, i32, i32) {
    %c0_i32 = arith.constant 0 : i32
    %c0_i32_0 = arith.constant 0 : i32
    %c0_i32_1 = arith.constant 0 : i32
    %c0_i32_2 = arith.constant 0 : i32
    return %c0_i32, %c0_i32_0, %c0_i32_1 : i32, i32, i32
  }
  func.func @transform_14(%arg0: i32, %arg1: memref<1x2xi32, #tpu.memory_space<smem>>) -> (i32, i32) {
    %c0_i32 = arith.constant 0 : i32
    %c0_i32_0 = arith.constant 0 : i32
    %c0_i32_1 = arith.constant 0 : i32
    return %c0_i32, %c0_i32_0 : i32, i32
  }
  func.func @transform_15(%arg0: i32, %arg1: memref<1x2xi32, #tpu.memory_space<smem>>) -> (i32, i32) {
    %c0_i32 = arith.constant 0 : i32
    %c0_i32_0 = arith.constant 0 : i32
    %c0_i32_1 = arith.constant 0 : i32
    return %c0_i32, %c0_i32_0 : i32, i32
  }
  func.func @transform_16(%arg0: i32, %arg1: memref<1x2xi32, #tpu.memory_space<smem>>) -> (i32, i32, i32) {
    %c0_i32 = arith.constant 0 : i32
    %c0_i32_0 = arith.constant 0 : i32
    %c0_i32_1 = arith.constant 0 : i32
    return %arg0, %c0_i32, %c0_i32_0 : i32, i32, i32
  }
  func.func @transform_17(%arg0: i32, %arg1: memref<1x2xi32, #tpu.memory_space<smem>>) -> (i32, i32, i32) {
    %c0_i32 = arith.constant 0 : i32
    %c0_i32_0 = arith.constant 0 : i32
    %c0_i32_1 = arith.constant 0 : i32
    %c0_i32_2 = arith.constant 0 : i32
    return %c0_i32, %c0_i32_0, %c0_i32_1 : i32, i32, i32
  }
  func.func @transform_18(%arg0: i32, %arg1: memref<1x2xi32, #tpu.memory_space<smem>>) -> (i32, i32, i32) {
    %c0_i32 = arith.constant 0 : i32
    %c0_i32_0 = arith.constant 0 : i32
    %c0_i32_1 = arith.constant 0 : i32
    %c0_i32_2 = arith.constant 0 : i32
    return %c0_i32, %c0_i32_0, %c0_i32_1 : i32, i32, i32
  }
}

</mosaic_0001>

<llo_original>
// kernel: decoder_forward.1
$region0: #{decoder_forward.1}
  #allocation0 [shape = 'u32[]', space=smem, size = 0x4, offset = 0x4, fixed_abs, tag = 'smem constant byte address 0x4 - core index']
  #allocation1 [shape = 'u32[72,128]{1,0:T(1,128)}', space=vmem, size = 0x9000, scoped, tag = 'internal scratch']
  #allocation2 [shape = 'f32[2,2,32]{2,1,0:T(2,128)}', space=vmem, size = 0x800, scoped, tag = 'scratch operand']
  #allocation3 [shape = 'f32[2,2,32]{2,1,0:T(2,128)}', space=vmem, size = 0x800, scoped, tag = 'scratch operand']
  #allocation4 [shape = 's32[1]{0}', space=sflag, size = 0x4, scoped, tag = 'scoped memory for decoder_forward.1']
  #allocation5 [shape = 'u8[512]{0}', space=smem, size = 0x200, scoped, tag = 'prefetched SMEM operand 0']
  #allocation6 [shape = 'f32[1,1]{1,0:T(1,128)S(1)}', space=vmem, size = 0x200, scoped, tag = 'scoped memory for decoder_forward.1']
  %s0 = inlined_call_operand.vmem [shape: s32[1,2], index: 0, kind: input, shape index: {}]
  %s1 = inlined_call_operand.vmem [shape: f32[64,16], index: 1, kind: input, shape index: {}]
  %s2 = inlined_call_operand.vmem [shape: f32[8,2,64], index: 2, kind: input, shape index: {}]
  %s3 = inlined_call_operand.vmem [shape: f32[2,2,32], index: 3, kind: input, shape index: {}]
  %s4 = inlined_call_operand.vmem [shape: f32[2,2,32], index: 4, kind: input, shape index: {}]
  %s5 = inlined_call_operand.vmem [shape: f32[1,1,32], index: 5, kind: input, shape index: {}]
  %s6 = inlined_call_operand.hbm [shape: f32[1,1,64], index: 6, kind: input, shape index: {}]
  %s7 = inlined_call_operand.<no memory space> [shape: f32[1,1], index: 7, kind: input, shape index: {}]
  %s8 = inlined_call_operand.vmem [shape: f32[64,128], index: 8, kind: input, shape index: {}]
  %s9 = inlined_call_operand.hbm [shape: f32[16,128], index: 9, kind: input, shape index: {}]
  %s10 = inlined_call_operand.hbm [shape: f32[32,128], index: 10, kind: input, shape index: {}]
  %s11 = inlined_call_operand.hbm [shape: f32[1,128], index: 11, kind: input, shape index: {}]
  %s12 = inlined_call_operand.hbm [shape: f32[1,32,128], index: 12, kind: input, shape index: {}]
  %s13 = inlined_call_operand.hbm [shape: f32[1,32,128], index: 13, kind: input, shape index: {}]
  %s14 = inlined_call_operand.hbm [shape: f32[1,1,128], index: 14, kind: input, shape index: {}]
  %s15 = inlined_call_operand.hbm [shape: f32[32,128], index: 15, kind: input, shape index: {}]
  %s16 = inlined_call_operand.hbm [shape: f32[1,128], index: 16, kind: input, shape index: {}]
  %s17 = inlined_call_operand.vmem [shape: f32[1,2,128], index: 17, kind: output, shape index: {0}]
  %s18 = inlined_call_operand.hbm [shape: f32[2,2,32], index: 18, kind: output, shape index: {1}]
  %s19 = inlined_call_operand.hbm [shape: f32[2,2,32], index: 19, kind: output, shape index: {2}]
  %20 = xla_tuple %s17, %s18, %s19
  %s21 = sld [smem:[#allocation0]]
  $region134: #{decoder_forward.1} parent=0
    _
  %s23 = ssub.s32 1, %s21
  %s24 = scalar_select 0, %s23, %s21
  %s26 = sshll.u32 %s0, 4
  %s27 = int_to_ptr.vmem [resolvable:$true] %s26
  %29 = dma.vmem_to_smem %s27, 16, [#allocation5], [#allocation4]
  %v30 = vstv %s7
  %31 = vst [vmem:[#allocation6] sm:$0x1] %v30
  %33 = dma.done [#allocation4], 16
  %34 = sfence
  $region1: #{decoder_forward.1} parent=0
    #allocation7 [shape = 'u8[512]{0}', space=vmem, size = 0x400, scoped, tag = 'input window, operand 6, single buffered']
    #allocation8 [shape = 's32[1]{0}', space=sflag, size = 0x4, scoped, tag = 'scoped memory for decoder_forward.1']
    #allocation9 [shape = 's32[1]{0}', space=sflag, size = 0x4, scoped, tag = 'scoped memory for decoder_forward.1']
    #allocation10 [shape = 'u8[8192]{0}', space=vmem, size = 0x2000, scoped, tag = 'input window, operand 9, single buffered']
    #allocation11 [shape = 's32[1]{0}', space=sflag, size = 0x4, scoped, tag = 'scoped memory for decoder_forward.1']
    #allocation12 [shape = 'u8[16384]{0}', space=vmem, size = 0x4000, scoped, tag = 'input window, operand 10, single buffered']
    #allocation13 [shape = 'u8[512]{0}', space=vmem, size = 0x400, scoped, tag = 'input window, operand 11, single buffered']
    #allocation14 [shape = 's32[1]{0}', space=sflag, size = 0x4, scoped, tag = 'scoped memory for decoder_forward.1']
    #allocation15 [shape = 'u8[16384]{0}', space=vmem, size = 0x4000, scoped, tag = 'input window, operand 12, single buffered']
    #allocation16 [shape = 'u8[16384]{0}', space=vmem, size = 0x4000, scoped, tag = 'input window, operand 13, single buffered']
    #allocation17 [shape = 's32[1]{0}', space=sflag, size = 0x4, scoped, tag = 'scoped memory for decoder_forward.1']
    #allocation18 [shape = 'u8[512]{0}', space=vmem, size = 0x400, scoped, tag = 'input window, operand 14, single buffered']
    #allocation19 [shape = 'u8[16384]{0}', space=vmem, size = 0x4000, scoped, tag = 'input window, operand 15, single buffered']
    #allocation20 [shape = 's32[1]{0}', space=sflag, size = 0x4, scoped, tag = 'scoped memory for decoder_forward.1']
    #allocation21 [shape = 'u8[512]{0}', space=vmem, size = 0x400, scoped, tag = 'input window, operand 16, single buffered']
    #allocation22 [shape = 'u8[2048]{0}', space=vmem, size = 0x800, scoped, tag = 'output window, operand 1, single buffered']
    #allocation23 [shape = 'u8[2048]{0}', space=vmem, size = 0x800, scoped, tag = 'output window, operand 2, single buffered']
    #allocation24 [shape = 's32[1]{0}', space=sflag, size = 0x4, scoped, tag = 'scoped memory for decoder_forward.1']
    %35 = vsyncpa [#allocation8], 0
    %36 = vsyncpa [#allocation11], 0
    %37 = vsyncpa [#allocation14], 0
    %38 = vsyncpa [#allocation17], 0
    %39 = vsyncpa [#allocation20], 0
    %40 = vsyncpa [#allocation9], 0
    %41 = vsyncpa [#allocation24], 0
    // Predicated region
    $region2: #{decoder_forward.1} parent=1 // pred_check
      _
    $region3: #{decoder_forward.1} parent=1 // pred_check_branch
      %43 = sbr.rel (0) target = $region5
    $region4: #{decoder_forward.1} parent=1 // pred_region
      _
    $region5: #{decoder_forward.1} parent=1 // pred_fallthru
      _
    // Predicated region
    $region6: #{decoder_forward.1} parent=1 // pred_check
      _
    $region7: #{decoder_forward.1} parent=1 // pred_check_branch
      %45 = sbr.rel (0) target = $region9
    $region8: #{decoder_forward.1} parent=1 // pred_region
      _
    $region9: #{decoder_forward.1} parent=1 // pred_fallthru
      _
    // Predicated region
    $region10: #{decoder_forward.1} parent=1 // pred_check
      _
    $region11: #{decoder_forward.1} parent=1 // pred_check_branch
      %47 = sbr.rel (0) target = $region13
    $region12: #{decoder_forward.1} parent=1 // pred_region
      _
    $region13: #{decoder_forward.1} parent=1 // pred_fallthru
      _
    // Predicated region
    $region14: #{decoder_forward.1} parent=1 // pred_check
      _
    $region15: #{decoder_forward.1} parent=1 // pred_check_branch
      %49 = sbr.rel (0) target = $region17
    $region16: #{decoder_forward.1} parent=1 // pred_region
      _
    $region17: #{decoder_forward.1} parent=1 // pred_fallthru
      _
    // Predicated region
    $region18: #{decoder_forward.1} parent=1 // pred_check
      _
    $region19: #{decoder_forward.1} parent=1 // pred_check_branch
      %51 = sbr.rel (0) target = $region21
    $region20: #{decoder_forward.1} parent=1 // pred_region
      _
    $region21: #{decoder_forward.1} parent=1 // pred_fallthru
      _
    // Predicated region
    $region22: #{decoder_forward.1} parent=1 // pred_check
      _
    $region23: #{decoder_forward.1} parent=1 // pred_check_branch
      %53 = sbr.rel (0) target = $region25
    $region24: #{decoder_forward.1} parent=1 // pred_region
      %55 = vsyncadd [#allocation8], 0
      %s57 = sshll.u32 %s6, 4
      %s58 = int_to_ptr.hbm [resolvable:$true] %s57
      %s59 = sshll.u32 [#allocation7], 4
      %s60 = int_to_ptr.vmem [resolvable:$true] %s59
      %62 = dma.hbm_to_vmem [thread:$0]  %s58, 16, %s60, [#allocation8]
    $region25: #{decoder_forward.1} parent=1 // pred_fallthru
      _
    // Predicated region
    $region26: #{decoder_forward.1} parent=1 // pred_check
      _
    $region27: #{decoder_forward.1} parent=1 // pred_check_branch
      %64 = sbr.rel (0) target = $region29
    $region28: #{decoder_forward.1} parent=1 // pred_region
      _
    $region29: #{decoder_forward.1} parent=1 // pred_fallthru
      _
    // Predicated region
    $region30: #{decoder_forward.1} parent=1 // pred_check
      _
    $region31: #{decoder_forward.1} parent=1 // pred_check_branch
      %66 = sbr.rel (0) target = $region33
    $region32: #{decoder_forward.1} parent=1 // pred_region
      _
    $region33: #{decoder_forward.1} parent=1 // pred_fallthru
      _
    // Predicated region
    $region34: #{decoder_forward.1} parent=1 // pred_check
      _
    $region35: #{decoder_forward.1} parent=1 // pred_check_branch
      %68 = sbr.rel (0) target = $region37
    $region36: #{decoder_forward.1} parent=1 // pred_region
      %70 = vsyncadd [#allocation11], 0
      %s71 = sshll.u32 %s9, 4
      %s72 = int_to_ptr.hbm [resolvable:$true] %s71
      %s73 = sshll.u32 [#allocation10], 4
      %s74 = int_to_ptr.vmem [resolvable:$true] %s73
      %79 = dma.hbm_to_vmem [thread:$0]  %s72, 256, %s74, [#allocation11], 128, 128, 8
    $region37: #{decoder_forward.1} parent=1 // pred_fallthru
      _
    // Predicated region
    $region38: #{decoder_forward.1} parent=1 // pred_check
      _
    $region39: #{decoder_forward.1} parent=1 // pred_check_branch
      %81 = sbr.rel (0) target = $region41
    $region40: #{decoder_forward.1} parent=1 // pred_region
      %83 = vsyncadd [#allocation11], 0
      %s84 = sshll.u32 %s10, 4
      %s85 = int_to_ptr.hbm [resolvable:$true] %s84
      %s86 = sshll.u32 [#allocation12], 4
      %s87 = int_to_ptr.vmem [resolvable:$true] %s86
      %92 = dma.hbm_to_vmem [thread:$0]  %s85, 512, %s87, [#allocation11], 128, 128, 8
    $region41: #{decoder_forward.1} parent=1 // pred_fallthru
      _
    // Predicated region
    $region42: #{decoder_forward.1} parent=1 // pred_check
      _
    $region43: #{decoder_forward.1} parent=1 // pred_check_branch
      %94 = sbr.rel (0) target = $region45
    $region44: #{decoder_forward.1} parent=1 // pred_region
      %96 = vsyncadd [#allocation14], 0
      %s98 = sshll.u32 %s11, 4
      %s99 = int_to_ptr.hbm [resolvable:$true] %s98
      %s100 = sshll.u32 [#allocation13], 4
      %s101 = int_to_ptr.vmem [resolvable:$true] %s100
      %103 = dma.hbm_to_vmem [thread:$0]  %s99, 16, %s101, [#allocation14]
    $region45: #{decoder_forward.1} parent=1 // pred_fallthru
      _
    // Predicated region
    $region46: #{decoder_forward.1} parent=1 // pred_check
      _
    $region47: #{decoder_forward.1} parent=1 // pred_check_branch
      %105 = sbr.rel (0) target = $region49
    $region48: #{decoder_forward.1} parent=1 // pred_region
      %107 = vsyncadd [#allocation14], 0
      %s108 = sshll.u32 %s12, 4
      %s109 = int_to_ptr.hbm [resolvable:$true] %s108
      %s110 = sshll.u32 [#allocation15], 4
      %s111 = int_to_ptr.vmem [resolvable:$true] %s110
      %116 = dma.hbm_to_vmem [thread:$0]  %s109, 512, %s111, [#allocation14], 128, 128, 8
    $region49: #{decoder_forward.1} parent=1 // pred_fallthru
      _
    // Predicated region
    $region50: #{decoder_forward.1} parent=1 // pred_check
      _
    $region51: #{decoder_forward.1} parent=1 // pred_check_branch
      %118 = sbr.rel (0) target = $region53
    $region52: #{decoder_forward.1} parent=1 // pred_region
      %120 = vsyncadd [#allocation17], 0
      %s121 = sshll.u32 %s13, 4
      %s122 = int_to_ptr.hbm [resolvable:$true] %s121
      %s123 = sshll.u32 [#allocation16], 4
      %s124 = int_to_ptr.vmem [resolvable:$true] %s123
      %129 = dma.hbm_to_vmem [thread:$0]  %s122, 512, %s124, [#allocation17], 128, 128, 8
    $region53: #{decoder_forward.1} parent=1 // pred_fallthru
      _
    // Predicated region
    $region54: #{decoder_forward.1} parent=1 // pred_check
      _
    $region55: #{decoder_forward.1} parent=1 // pred_check_branch
      %131 = sbr.rel (0) target = $region57
    $region56: #{decoder_forward.1} parent=1 // pred_region
      %133 = vsyncadd [#allocation17], 0
      %s135 = sshll.u32 %s14, 4
      %s136 = int_to_ptr.hbm [resolvable:$true] %s135
      %s137 = sshll.u32 [#allocation18], 4
      %s138 = int_to_ptr.vmem [resolvable:$true] %s137
      %140 = dma.hbm_to_vmem [thread:$0]  %s136, 16, %s138, [#allocation17]
    $region57: #{decoder_forward.1} parent=1 // pred_fallthru
      _
    // Predicated region
    $region58: #{decoder_forward.1} parent=1 // pred_check
      _
    $region59: #{decoder_forward.1} parent=1 // pred_check_branch
      %142 = sbr.rel (0) target = $region61
    $region60: #{decoder_forward.1} parent=1 // pred_region
      %144 = vsyncadd [#allocation20], 0
      %s145 = sshll.u32 %s15, 4
      %s146 = int_to_ptr.hbm [resolvable:$true] %s145
      %s147 = sshll.u32 [#allocation19], 4
      %s148 = int_to_ptr.vmem [resolvable:$true] %s147
      %153 = dma.hbm_to_vmem [thread:$0]  %s146, 512, %s148, [#allocation20], 128, 128, 8
    $region61: #{decoder_forward.1} parent=1 // pred_fallthru
      _
    // Predicated region
    $region62: #{decoder_forward.1} parent=1 // pred_check
      _
    $region63: #{decoder_forward.1} parent=1 // pred_check_branch
      %155 = sbr.rel (0) target = $region65
    $region64: #{decoder_forward.1} parent=1 // pred_region
      %157 = vsyncadd [#allocation20], 0
      %s159 = sshll.u32 %s16, 4
      %s160 = int_to_ptr.hbm [resolvable:$true] %s159
      %s161 = sshll.u32 [#allocation21], 4
      %s162 = int_to_ptr.vmem [resolvable:$true] %s161
      %164 = dma.hbm_to_vmem [thread:$0]  %s160, 16, %s162, [#allocation20]
    $region65: #{decoder_forward.1} parent=1 // pred_fallthru
      _
    // Predicated region
    $region66: #{decoder_forward.1} parent=1 // pred_check
      _
    $region67: #{decoder_forward.1} parent=1 // pred_check_branch
      %166 = sbr.rel (0) target = $region69
    $region68: #{decoder_forward.1} parent=1 // pred_region
      %168 = dma.done [#allocation8], 16
    $region69: #{decoder_forward.1} parent=1 // pred_fallthru
      _
    // Predicated region
    $region70: #{decoder_forward.1} parent=1 // pred_check
      _
    $region71: #{decoder_forward.1} parent=1 // pred_check_branch
      %170 = sbr.rel (0) target = $region73
    $region72: #{decoder_forward.1} parent=1 // pred_region
      %172 = dma.done [#allocation11], 256
    $region73: #{decoder_forward.1} parent=1 // pred_fallthru
      _
    // Predicated region
    $region74: #{decoder_forward.1} parent=1 // pred_check
      _
    $region75: #{decoder_forward.1} parent=1 // pred_check_branch
      %174 = sbr.rel (0) target = $region77
    $region76: #{decoder_forward.1} parent=1 // pred_region
      %176 = dma.done [#allocation11], 512
    $region77: #{decoder_forward.1} parent=1 // pred_fallthru
      _
    // Predicated region
    $region78: #{decoder_forward.1} parent=1 // pred_check
      _
    $region79: #{decoder_forward.1} parent=1 // pred_check_branch
      %178 = sbr.rel (0) target = $region81
    $region80: #{decoder_forward.1} parent=1 // pred_region
      %180 = dma.done [#allocation14], 16
    $region81: #{decoder_forward.1} parent=1 // pred_fallthru
      _
    // Predicated region
    $region82: #{decoder_forward.1} parent=1 // pred_check
      _
    $region83: #{decoder_forward.1} parent=1 // pred_check_branch
      %182 = sbr.rel (0) target = $region85
    $region84: #{decoder_forward.1} parent=1 // pred_region
      %184 = dma.done [#allocation14], 512
    $region85: #{decoder_forward.1} parent=1 // pred_fallthru
      _
    // Predicated region
    $region86: #{decoder_forward.1} parent=1 // pred_check
      _
    $region87: #{decoder_forward.1} parent=1 // pred_check_branch
      %186 = sbr.rel (0) target = $region89
    $region88: #{decoder_forward.1} parent=1 // pred_region
      %188 = dma.done [#allocation17], 512
    $region89: #{decoder_forward.1} parent=1 // pred_fallthru
      _
    // Predicated region
    $region90: #{decoder_forward.1} parent=1 // pred_check
      _
    $region91: #{decoder_forward.1} parent=1 // pred_check_branch
      %190 = sbr.rel (0) target = $region93
    $region92: #{decoder_forward.1} parent=1 // pred_region
      %192 = dma.done [#allocation17], 16
    $region93: #{decoder_forward.1} parent=1 // pred_fallthru
      _
    // Predicated region
    $region94: #{decoder_forward.1} parent=1 // pred_check
      _
    $region95: #{decoder_forward.1} parent=1 // pred_check_branch
      %194 = sbr.rel (0) target = $region97
    $region96: #{decoder_forward.1} parent=1 // pred_region
      %196 = dma.done [#allocation20], 512
    $region97: #{decoder_forward.1} parent=1 // pred_fallthru
      _
    // Predicated region
    $region98: #{decoder_forward.1} parent=1 // pred_check
      _
    $region99: #{decoder_forward.1} parent=1 // pred_check_branch
      %198 = sbr.rel (0) target = $region101
    $region100: #{decoder_forward.1} parent=1 // pred_region
      %200 = dma.done [#allocation20], 16
    $region101: #{decoder_forward.1} parent=1 // pred_fallthru
      _
    %p201 = scmp.eq.s32.totalorder 0, 0
    // Predicated region
    $region102: #{decoder_forward.1} parent=1 // pred_check
      %p202 = pneg %p201
    $region103: #{decoder_forward.1} parent=1 // pred_check_branch
      %204 = sbr.rel (%p202) target = $region105
    $region104: #{decoder_forward.1} parent=1 // pred_region
      %v205 = vld [vmem:[%s3] sm:$0x3]
      %v206 = vld [vmem:[%s3 + $0x2] sm:$0x3]
      %vm207 = vcmask 254976
      %208 = vst.msk [vmem:[#allocation2] sm:$0x3] %vm207, %v205
      %209 = vst.msk [vmem:[#allocation2 + $0x2] sm:$0x3] %vm207, %v206
      %v210 = vld [vmem:[%s4] sm:$0x3]
      %v211 = vld [vmem:[%s4 + $0x2] sm:$0x3]
      %212 = vst.msk [vmem:[#allocation3] sm:$0x3] %vm207, %v210
      %213 = vst.msk [vmem:[#allocation3 + $0x2] sm:$0x3] %vm207, %v211
    $region105: #{decoder_forward.1} parent=1 // pred_fallthru
      _
    %v214 = vld [vmem:[%s2] sm:$0x3]
    %v215 = vld [vmem:[%s2 + $0x2] sm:$0x3]
    %v216 = vld [vmem:[%s2 + $0x4] sm:$0x3]
    %v217 = vld [vmem:[%s2 + $0x6] sm:$0x3]
    %v218 = vld [vmem:[%s2 + $0x8] sm:$0x3]
    %v219 = vld [vmem:[%s2 + $0xa] sm:$0x3]
    %v220 = vld [vmem:[%s2 + $0xc] sm:$0x3]
    %v221 = vld [vmem:[%s2 + $0xe] sm:$0x3]
    %v222 = vld [vmem:[#allocation2] sm:$0x3]
    %v223 = vld [vmem:[#allocation2 + $0x2] sm:$0x3]
    %v224 = vld [vmem:[#allocation3] sm:$0x3]
    %v225 = vld [vmem:[#allocation3 + $0x2] sm:$0x3]
    %v226 = vld [vmem:[%s5] sm:$0x1]
    %v228 = vperm.slane %v226, 0
    %v230 = vmul.f32 %v222, %v228
    %v231 = vmul.f32 %v223, %v228
    %vm232 = vcmask 254976
    %v233 = vsel %vm232, %v230, 0.0
    %234 = vadd.xlane.f32.xlu0 %v233
    %v235 = vpop.xlane.xlu0 %234
    %v236 = vsel %vm232, %v231, 0.0
    %237 = vadd.xlane.f32.xlu0 %v236
    %v238 = vpop.xlane.xlu0 %237
    %v239 = vld [vmem:[#allocation7] sm:$0x1]
    %v241 = vperm.slane %v239, 0
    %v243 = vmul.f32 %v214, %v241
    %v244 = vmul.f32 %v215, %v241
    %v245 = vmul.f32 %v216, %v241
    %v246 = vmul.f32 %v217, %v241
    %v247 = vmul.f32 %v218, %v241
    %v248 = vmul.f32 %v219, %v241
    %v249 = vmul.f32 %v220, %v241
    %v250 = vmul.f32 %v221, %v241
    %vm251 = vcmask 517120
    %v252 = vsel %vm251, %v243, 0.0
    %253 = vadd.xlane.f32.xlu0 %v252
    %v254 = vpop.xlane.xlu0 %253
    %v255 = vsel %vm251, %v244, 0.0
    %256 = vadd.xlane.f32.xlu0 %v255
    %v257 = vpop.xlane.xlu0 %256
    %v258 = vsel %vm251, %v245, 0.0
    %259 = vadd.xlane.f32.xlu0 %v258
    %v260 = vpop.xlane.xlu0 %259
    %v261 = vsel %vm251, %v246, 0.0
    %262 = vadd.xlane.f32.xlu0 %v261
    %v263 = vpop.xlane.xlu0 %262
    %v264 = vsel %vm251, %v247, 0.0
    %265 = vadd.xlane.f32.xlu0 %v264
    %v266 = vpop.xlane.xlu0 %265
    %v267 = vsel %vm251, %v248, 0.0
    %268 = vadd.xlane.f32.xlu0 %v267
    %v269 = vpop.xlane.xlu0 %268
    %v270 = vsel %vm251, %v249, 0.0
    %271 = vadd.xlane.f32.xlu0 %v270
    %v272 = vpop.xlane.xlu0 %271
    %v273 = vsel %vm251, %v250, 0.0
    %274 = vadd.xlane.f32.xlu0 %v273
    %v275 = vpop.xlane.xlu0 %274
    %v278 = vlaneseq
    %v279 = vand.u32 %v278, 127
    %v280 = vperm.slane %v235, %v279
    %v281 = vperm.slane %v238, %v279
    %vm282 = vcmask 1041409
    %v283 = vsel %vm282, %v281, %v280
    %vm285 = vcmask 1043459
    %v286 = vsel %vm285, %v281, %v280
    %vm288 = vcmask 1045509
    %v289 = vsel %vm288, %v281, %v280
    %vm291 = vcmask 1047559
    %v292 = vsel %vm291, %v281, %v280
    %vm294 = vcmask 1041408
    %v295 = vsel %vm294, %v283, %v286
    %vm296 = vcmask 1043456
    %v297 = vsel %vm296, %v295, %v289
    %vm298 = vcmask 1045504
    %v299 = vsel %vm298, %v297, %v292
    %v308 = vperm.slane %v254, %v279
    %v309 = vperm.slane %v257, %v279
    %v310 = vperm.slane %v260, %v279
    %v311 = vperm.slane %v263, %v279
    %v312 = vperm.slane %v266, %v279
    %v313 = vperm.slane %v269, %v279
    %v314 = vperm.slane %v272, %v279
    %v315 = vperm.slane %v275, %v279
    %v316 = vsel %vm282, %v309, %v308
    %vm317 = vcmask 1042434
    %v318 = vsel %vm317, %v310, %v316
    %v319 = vsel %vm285, %v311, %v318
    %vm320 = vcmask 1044484
    %v321 = vsel %vm320, %v312, %v319
    %v322 = vsel %vm288, %v313, %v321
    %vm323 = vcmask 1046534
    %v324 = vsel %vm323, %v314, %v322
    %v325 = vsel %vm291, %v315, %v324
    %v327 = vadd.f32 %v299, %v325
    %v328 = vld [vmem:[#allocation6] sm:$0x1]
    %v330 = vperm.slane %v328, 0
    %331 = vset.pattern.permute.xlu0 0
    %332 = vperm.xlu0 %331, %v330
    %v333 = vpop.permute.xlu0 %332
    %v335 = vadd.f32 %v327, %v333
    %v336 = vmax.f32 %v335, 0.0
    %vm337 = vcmask 15360
    %v338 = vsel %vm337, %v336, -inf
    %v339 = vrot.slane %v338, 4
    %v340 = vmax.f32 %v338, %v339
    %v341 = vrot.slane %v340, 2
    %v342 = vmax.f32 %v340, %v341
    %v343 = vrot.slane %v342, 1
    %v344 = vmax.f32 %v342, %v343
    %v345 = vsub.f32 %v336, %v344
    %v346 = vmul.f32 %v345, 1.442695
    %v347 = vpow.pop %v346
    %v348 = vsel %vm337, %v347, 0.0
    %v349 = vadd.f32 %v348, %v348
    %v350 = vrot.slane %v349, 4
    %v351 = vadd.f32 %v349, %v350
    %v352 = vrot.slane %v351, 2
    %v353 = vadd.f32 %v351, %v352
    %v354 = vrot.slane %v353, 1
    %v355 = vadd.f32 %v353, %v354
    %v356 = vrcp.pop %v355
    %v357 = vmul.f32 %v355, %v356
    %v358 = vsub.f32 1.0, %v357
    %v359 = vmul.f32 %v356, %v358
    %v360 = vadd.f32 %v356, %v359
    %vm361 = vweird.f32 %v355
    %vm362 = vweird.f32 %v356
    %vm363 = vmor %vm361, %vm362
    %v364 = vsel %vm363, %v356, %v360
    %v365 = vand.u32 2147483647, %v355
    %vm366 = vcmp.eq.f32.partialorder %v365, 8.507059e+37
    %v367 = vand.u32 %v355, 2147483648
    %v368 = vor.u32 1.1754944e-38, %v367
    %v369 = vsel %vm366, %v368, %v364
    %v370 = vmul.f32 %v347, %v369
    %v371 = vadd.f32 %v370, %v370
    %v372 = vperm.slane %v371, 0
    %v373 = vlaneseq
    %v374 = vshrl.u32 %v373, 7
    %376 = vset.pattern.permute.xlu0 %v374
    %377 = vperm.xlu0 %376, %v372
    %v378 = vpop.permute.xlu0 %377
    %v379 = vperm.slane %v371, 1
    %v380 = vlaneseq
    %v381 = vshrl.u32 %v380, 7
    %383 = vset.pattern.permute.xlu0 %v381
    %384 = vperm.xlu0 %383, %v379
    %v385 = vpop.permute.xlu0 %384
    %v386 = vperm.slane %v371, 2
    %v387 = vlaneseq
    %v388 = vshrl.u32 %v387, 7
    %390 = vset.pattern.permute.xlu0 %v388
    %391 = vperm.xlu0 %390, %v386
    %v392 = vpop.permute.xlu0 %391
    %v393 = vperm.slane %v371, 3
    %v394 = vlaneseq
    %v395 = vshrl.u32 %v394, 7
    %397 = vset.pattern.permute.xlu0 %v395
    %398 = vperm.xlu0 %397, %v393
    %v399 = vpop.permute.xlu0 %398
    %v400 = vperm.slane %v371, 4
    %v401 = vlaneseq
    %v402 = vshrl.u32 %v401, 7
    %404 = vset.pattern.permute.xlu0 %v402
    %405 = vperm.xlu0 %404, %v400
    %v406 = vpop.permute.xlu0 %405
    %v407 = vperm.slane %v371, 5
    %v408 = vlaneseq
    %v409 = vshrl.u32 %v408, 7
    %411 = vset.pattern.permute.xlu0 %v409
    %412 = vperm.xlu0 %411, %v407
    %v413 = vpop.permute.xlu0 %412
    %v414 = vperm.slane %v371, 6
    %v415 = vlaneseq
    %v416 = vshrl.u32 %v415, 7
    %418 = vset.pattern.permute.xlu0 %v416
    %419 = vperm.xlu0 %418, %v414
    %v420 = vpop.permute.xlu0 %419
    %v421 = vperm.slane %v371, 7
    %v422 = vlaneseq
    %v423 = vshrl.u32 %v422, 7
    %425 = vset.pattern.permute.xlu0 %v423
    %426 = vperm.xlu0 %425, %v421
    %v427 = vpop.permute.xlu0 %426
    %v428 = vmul.f32 %v378, %v214
    %v429 = vmul.f32 %v385, %v215
    %v430 = vmul.f32 %v392, %v216
    %v431 = vmul.f32 %v399, %v217
    %v432 = vmul.f32 %v406, %v218
    %v433 = vmul.f32 %v413, %v219
    %v434 = vmul.f32 %v420, %v220
    %v435 = vmul.f32 %v427, %v221
    %v436 = vsel %vm251, %v428, 0.0
    %v437 = vsel %vm251, %v429, 0.0
    %v438 = vadd.f32 %v436, %v437
    %v439 = vsel %vm251, %v430, 0.0
    %v440 = vadd.f32 %v438, %v439
    %v441 = vsel %vm251, %v431, 0.0
    %v442 = vadd.f32 %v440, %v441
    %v443 = vsel %vm251, %v432, 0.0
    %v444 = vadd.f32 %v442, %v443
    %v445 = vsel %vm251, %v433, 0.0
    %v446 = vadd.f32 %v444, %v445
    %v447 = vsel %vm251, %v434, 0.0
    %v448 = vadd.f32 %v446, %v447
    %v449 = vsel %vm251, %v435, 0.0
    %v450 = vadd.f32 %v448, %v449
    %s451 = smul.u32 0, 128
    %s452 = sld [smem:[#allocation5 + %s451]]
    %s453 = scalar_lea.vmem %s1, %s452
    %v454 = vld [vmem:[%s453] sm:$0x1]
    %s455 = sadd.s32 %s451, 1
    %s456 = sld [smem:[#allocation5 + %s455]]
    %s457 = scalar_lea.vmem %s1, %s456
    %v458 = vld [vmem:[%s457] sm:$0x1]
    %v460 = vrot.slane %v458, 7
    %vm462 = vcmask 1040384
    %v463 = vsel %vm462, %v454, %v460
    %v464 = vld [vmem:[%s8] sm:$0xff]
    %v465 = vld [vmem:[%s8 + $0x8] sm:$0xff]
    %v466 = vld [vmem:[%s8 + $0x10] sm:$0xff]
    %v467 = vld [vmem:[%s8 + $0x18] sm:$0xff]
    %v468 = vld [vmem:[%s8 + $0x20] sm:$0xff]
    %v469 = vld [vmem:[%s8 + $0x28] sm:$0xff]
    %v470 = vld [vmem:[%s8 + $0x30] sm:$0xff]
    %v471 = vld [vmem:[%s8 + $0x38] sm:$0xff]
    %v472 = vld [vmem:[#allocation10] sm:$0xff]
    %v473 = vld [vmem:[#allocation10 + $0x8] sm:$0xff]
    %vm474 = vcmask 130048
    %v476 = vsel %vm474, %v463, 0
    %478 = vmatpush.msra.mxu0 0.0
    %479 = vmatpush.msra.mxu0 0.0
    %480 = vmatpush.msra.mxu0 0.0
    %481 = vmatpush.msra.mxu0 0.0
    %482 = vmatpush.msra.mxu0 0.0
    %483 = vmatpush.msra.mxu0 0.0
    %484 = vmatpush.msra.mxu0 0.0
    %485 = vmatpush.msra.mxu0 0.0
    %486 = vmatpush.msra.mxu0 0.0
    %487 = vmatpush.msra.mxu0 0.0
    %488 = vmatpush.msra.mxu0 0.0
    %489 = vmatpush.msra.mxu0 0.0
    %490 = vmatpush.msra.mxu0 0.0
    %491 = vmatpush.msra.mxu0 0.0
    %492 = vmatpush.msra.mxu0 %v473
    %493 = vmatpush.msra.mxu0 %v472
    %494 = vmatmul.f32.gmra.mxu0 %v476
    %v495 = vpop.f32.mrf.mxu0
    %v496 = vadd.f32 0.0, %v495
    %497 = vdwg.mxu0
    %vm498 = vcmask 523264
    %v500 = vsel %vm498, %v450, 0
    %502 = vmatpush.msra.mxu0 0.0
    %503 = vmatpush.msra.mxu0 0.0
    %504 = vmatpush.msra.mxu0 0.0
    %505 = vmatpush.msra.mxu0 0.0
    %506 = vmatpush.msra.mxu0 0.0
    %507 = vmatpush.msra.mxu0 0.0
    %508 = vmatpush.msra.mxu0 0.0
    %509 = vmatpush.msra.mxu0 0.0
    %510 = vmatpush.msra.mxu0 %v471
    %511 = vmatpush.msra.mxu0 %v470
    %512 = vmatpush.msra.mxu0 %v469
    %513 = vmatpush.msra.mxu0 %v468
    %514 = vmatpush.msra.mxu0 %v467
    %515 = vmatpush.msra.mxu0 %v466
    %516 = vmatpush.msra.mxu0 %v465
    %517 = vmatpush.msra.mxu0 %v464
    %518 = vmatmul.f32.gmra.mxu0 %v500
    %v519 = vpop.f32.mrf.mxu0
    %v520 = vadd.f32 %v496, %v519
    %521 = vdwg.mxu0
    %v522 = vld [vmem:[#allocation12] sm:$0xff]
    %v523 = vld [vmem:[#allocation12 + $0x8] sm:$0xff]
    %v524 = vld [vmem:[#allocation12 + $0x10] sm:$0xff]
    %v525 = vld [vmem:[#allocation12 + $0x18] sm:$0xff]
    %vm526 = vcmask 261120
    %v528 = vsel %vm526, %v222, 0
    %530 = vmatpush.msra.mxu0 0.0
    %531 = vmatpush.msra.mxu0 0.0
    %532 = vmatpush.msra.mxu0 0.0
    %533 = vmatpush.msra.mxu0 0.0
    %534 = vmatpush.msra.mxu0 0.0
    %535 = vmatpush.msra.mxu0 0.0
    %536 = vmatpush.msra.mxu0 0.0
    %537 = vmatpush.msra.mxu0 0.0
    %538 = vmatpush.msra.mxu0 0.0
    %539 = vmatpush.msra.mxu0 0.0
    %540 = vmatpush.msra.mxu0 0.0
    %541 = vmatpush.msra.mxu0 0.0
    %542 = vmatpush.msra.mxu0 %v525
    %543 = vmatpush.msra.mxu0 %v524
    %544 = vmatpush.msra.mxu0 %v523
    %545 = vmatpush.msra.mxu0 %v522
    %546 = vmatmul.f32.gmra.mxu0 %v528
    %v547 = vpop.f32.mrf.mxu0
    %v548 = vadd.f32 0.0, %v547
    %549 = vdwg.mxu0
    %v550 = vadd.f32 %v520, %v548
    %v551 = vld [vmem:[#allocation13] sm:$0x1]
    %v553 = vperm.slane %v551, 0
    %v555 = vadd.f32 %v550, %v553
    %v556 = vxor.u32 %v555, 2147483648
    %v557 = vmul.f32 %v556, 1.442695
    %v558 = vpow.pop %v557
    %v559 = vadd.f32 %v558, 1.0
    %v560 = vrcp.pop %v559
    %v561 = vmul.f32 %v559, %v560
    %v562 = vsub.f32 1.0, %v561
    %v563 = vmul.f32 %v560, %v562
    %v564 = vadd.f32 %v560, %v563
    %vm565 = vweird.f32 %v559
    %vm566 = vweird.f32 %v560
    %vm567 = vmor %vm565, %vm566
    %v568 = vsel %vm567, %v560, %v564
    %v569 = vand.u32 2147483647, %v559
    %vm570 = vcmp.eq.f32.partialorder %v569, 8.507059e+37
    %v571 = vand.u32 %v559, 2147483648
    %v572 = vor.u32 1.1754944e-38, %v571
    %v573 = vsel %vm570, %v572, %v568
    %v574 = vmul.f32 1.0, %v573
    %v575 = vtanh.pop %v555
    %577 = vrot.lane.b32.xlu0 %v224, 32
    %v578 = vpop.permute.xlu0 %577
    %v580 = vmul.f32 %v574, %v578
    %582 = vrot.lane.b32.xlu0 %v575, 64
    %v583 = vpop.permute.xlu0 %582
    %v585 = vmul.f32 %v574, %v583
    %587 = vrot.lane.b32.xlu0 %v585, 32
    %v588 = vpop.permute.xlu0 %587
    %v590 = vadd.f32 %v580, %v588
    %v591 = vtanh.pop %v590
    %593 = vrot.lane.b32.xlu0 %v591, 64
    %v594 = vpop.permute.xlu0 %593
    %v596 = vmul.f32 %v574, %v594
    %598 = vrot.lane.b32.xlu0 %v596, 32
    %v599 = vpop.permute.xlu0 %598
    %601 = vst.msk [vmem:[#allocation2] sm:$0x3] %vm232, %v599
    %603 = vrot.lane.b32.xlu0 %v590, 96
    %v604 = vpop.permute.xlu0 %603
    %606 = vst.msk [vmem:[#allocation3] sm:$0x3] %vm232, %v604
    %v607 = vld [vmem:[#allocation15] sm:$0xff]
    %v608 = vld [vmem:[#allocation15 + $0x8] sm:$0xff]
    %v609 = vld [vmem:[#allocation15 + $0x10] sm:$0xff]
    %v610 = vld [vmem:[#allocation15 + $0x18] sm:$0xff]
    %v611 = vld [vmem:[#allocation16] sm:$0xff]
    %v612 = vld [vmem:[#allocation16 + $0x8] sm:$0xff]
    %v613 = vld [vmem:[#allocation16 + $0x10] sm:$0xff]
    %v614 = vld [vmem:[#allocation16 + $0x18] sm:$0xff]
    %v616 = vsel %vm526, %v223, 0
    %618 = vmatpush.msra.mxu0 0.0
    %619 = vmatpush.msra.mxu0 0.0
    %620 = vmatpush.msra.mxu0 0.0
    %621 = vmatpush.msra.mxu0 0.0
    %622 = vmatpush.msra.mxu0 0.0
    %623 = vmatpush.msra.mxu0 0.0
    %624 = vmatpush.msra.mxu0 0.0
    %625 = vmatpush.msra.mxu0 0.0
    %626 = vmatpush.msra.mxu0 0.0
    %627 = vmatpush.msra.mxu0 0.0
    %628 = vmatpush.msra.mxu0 0.0
    %629 = vmatpush.msra.mxu0 0.0
    %630 = vmatpush.msra.mxu0 %v614
    %631 = vmatpush.msra.mxu0 %v613
    %632 = vmatpush.msra.mxu0 %v612
    %633 = vmatpush.msra.mxu0 %v611
    %634 = vmatmul.f32.gmra.mxu0 %v616
    %v635 = vpop.f32.mrf.mxu0
    %v636 = vadd.f32 0.0, %v635
    %637 = vdwg.mxu0
    %v638 = vsel %vm526, %v599, 0
    %640 = vmatpush.msra.mxu0 0.0
    %641 = vmatpush.msra.mxu0 0.0
    %642 = vmatpush.msra.mxu0 0.0
    %643 = vmatpush.msra.mxu0 0.0
    %644 = vmatpush.msra.mxu0 0.0
    %645 = vmatpush.msra.mxu0 0.0
    %646 = vmatpush.msra.mxu0 0.0
    %647 = vmatpush.msra.mxu0 0.0
    %648 = vmatpush.msra.mxu0 0.0
    %649 = vmatpush.msra.mxu0 0.0
    %650 = vmatpush.msra.mxu0 0.0
    %651 = vmatpush.msra.mxu0 0.0
    %652 = vmatpush.msra.mxu0 %v610
    %653 = vmatpush.msra.mxu0 %v609
    %654 = vmatpush.msra.mxu0 %v608
    %655 = vmatpush.msra.mxu0 %v607
    %656 = vmatmul.f32.gmra.mxu0 %v638
    %v657 = vpop.f32.mrf.mxu0
    %v658 = vadd.f32 %v636, %v657
    %659 = vdwg.mxu0
    %v660 = vld [vmem:[#allocation18] sm:$0x1]
    %v662 = vperm.slane %v660, 0
    %v664 = vadd.f32 %v658, %v662
    %v665 = vxor.u32 %v664, 2147483648
    %v666 = vmul.f32 %v665, 1.442695
    %v667 = vpow.pop %v666
    %v668 = vadd.f32 %v667, 1.0
    %v669 = vrcp.pop %v668
    %v670 = vmul.f32 %v668, %v669
    %v671 = vsub.f32 1.0, %v670
    %v672 = vmul.f32 %v669, %v671
    %v673 = vadd.f32 %v669, %v672
    %vm674 = vweird.f32 %v668
    %vm675 = vweird.f32 %v669
    %vm676 = vmor %vm674, %vm675
    %v677 = vsel %vm676, %v669, %v673
    %v678 = vand.u32 2147483647, %v668
    %vm679 = vcmp.eq.f32.partialorder %v678, 8.507059e+37
    %v680 = vand.u32 %v668, 2147483648
    %v681 = vor.u32 1.1754944e-38, %v680
    %v682 = vsel %vm679, %v681, %v677
    %v683 = vmul.f32 1.0, %v682
    %v684 = vtanh.pop %v664
    %686 = vrot.lane.b32.xlu0 %v225, 32
    %v687 = vpop.permute.xlu0 %686
    %v689 = vmul.f32 %v683, %v687
    %691 = vrot.lane.b32.xlu0 %v684, 64
    %v692 = vpop.permute.xlu0 %691
    %v694 = vmul.f32 %v683, %v692
    %696 = vrot.lane.b32.xlu0 %v694, 32
    %v697 = vpop.permute.xlu0 %696
    %v699 = vadd.f32 %v689, %v697
    %v700 = vtanh.pop %v699
    %702 = vrot.lane.b32.xlu0 %v700, 64
    %v703 = vpop.permute.xlu0 %702
    %v705 = vmul.f32 %v683, %v703
    %707 = vrot.lane.b32.xlu0 %v705, 32
    %v708 = vpop.permute.xlu0 %707
    %s710 = scalar_lea.vmem [#allocation2], 2
    %711 = vst.msk [vmem:[%s710] sm:$0x3] %vm232, %v708
    %713 = vrot.lane.b32.xlu0 %v699, 96
    %v714 = vpop.permute.xlu0 %713
    %s716 = scalar_lea.vmem [#allocation3], 2
    %717 = vst.msk [vmem:[%s716] sm:$0x3] %vm232, %v714
    %v718 = vld [vmem:[#allocation19] sm:$0xff]
    %v719 = vld [vmem:[#allocation19 + $0x8] sm:$0xff]
    %v720 = vld [vmem:[#allocation19 + $0x10] sm:$0xff]
    %v721 = vld [vmem:[#allocation19 + $0x18] sm:$0xff]
    %v722 = vld [vmem:[#allocation21] sm:$0x1]
    %v724 = vperm.slane %v722, 0
    %v726 = vsel %vm526, %v708, 0
    %728 = vmatpush.msra.mxu0 0.0
    %729 = vmatpush.msra.mxu0 0.0
    %730 = vmatpush.msra.mxu0 0.0
    %731 = vmatpush.msra.mxu0 0.0
    %732 = vmatpush.msra.mxu0 0.0
    %733 = vmatpush.msra.mxu0 0.0
    %734 = vmatpush.msra.mxu0 0.0
    %735 = vmatpush.msra.mxu0 0.0
    %736 = vmatpush.msra.mxu0 0.0
    %737 = vmatpush.msra.mxu0 0.0
    %738 = vmatpush.msra.mxu0 0.0
    %739 = vmatpush.msra.mxu0 0.0
    %740 = vmatpush.msra.mxu0 %v721
    %741 = vmatpush.msra.mxu0 %v720
    %742 = vmatpush.msra.mxu0 %v719
    %743 = vmatpush.msra.mxu0 %v718
    %744 = vmatmul.f32.gmra.mxu0 %v726
    %v745 = vpop.f32.mrf.mxu0
    %v746 = vadd.f32 %v724, %v745
    %747 = vdwg.mxu0
    %748 = vst [vmem:[%s17] sm:$0x3] %v746
    // Predicated region
    $region106: #{decoder_forward.1} parent=1 // pred_check
      %p749 = pneg %p201
    $region107: #{decoder_forward.1} parent=1 // pred_check_branch
      %751 = sbr.rel (%p749) target = $region109
    $region108: #{decoder_forward.1} parent=1 // pred_region
      %v752 = vld [vmem:[#allocation2] sm:$0x3]
      %v753 = vld [vmem:[#allocation2 + $0x2] sm:$0x3]
      %754 = vst.msk [vmem:[#allocation22] sm:$0x3] %vm232, %v752
      %755 = vst.msk [vmem:[#allocation22 + $0x2] sm:$0x3] %vm232, %v753
      %v756 = vld [vmem:[#allocation3] sm:$0x3]
      %v757 = vld [vmem:[#allocation3 + $0x2] sm:$0x3]
      %758 = vst.msk [vmem:[#allocation23] sm:$0x3] %vm232, %v756
      %759 = vst.msk [vmem:[#allocation23 + $0x2] sm:$0x3] %vm232, %v757
    $region109: #{decoder_forward.1} parent=1 // pred_fallthru
      _
    // Predicated region
    $region110: #{decoder_forward.1} parent=1 // pred_check
      _
    $region111: #{decoder_forward.1} parent=1 // pred_check_branch
      %761 = sbr.rel (0) target = $region113
    $region112: #{decoder_forward.1} parent=1 // pred_region
      _
    $region113: #{decoder_forward.1} parent=1 // pred_fallthru
      _
    // Predicated region
    $region114: #{decoder_forward.1} parent=1 // pred_check
      _
    $region115: #{decoder_forward.1} parent=1 // pred_check_branch
      %763 = sbr.rel (0) target = $region117
    $region116: #{decoder_forward.1} parent=1 // pred_region
      %765 = vsyncadd [#allocation9], 0
      %s766 = sshll.u32 [#allocation22], 4
      %s767 = int_to_ptr.vmem [resolvable:$true] %s766
      %s768 = sshll.u32 %s18, 4
      %s769 = int_to_ptr.hbm [resolvable:$true] %s768
      %774 = dma.vmem_to_hbm [thread:$0]  %s767, 64, %s769, [#allocation9], 32, 32, 2
    $region117: #{decoder_forward.1} parent=1 // pred_fallthru
      _
    // Predicated region
    $region118: #{decoder_forward.1} parent=1 // pred_check
      _
    $region119: #{decoder_forward.1} parent=1 // pred_check_branch
      %776 = sbr.rel (0) target = $region121
    $region120: #{decoder_forward.1} parent=1 // pred_region
      %778 = vsyncadd [#allocation24], 0
      %s779 = sshll.u32 [#allocation23], 4
      %s780 = int_to_ptr.vmem [resolvable:$true] %s779
      %s781 = sshll.u32 %s19, 4
      %s782 = int_to_ptr.hbm [resolvable:$true] %s781
      %787 = dma.vmem_to_hbm [thread:$0]  %s780, 64, %s782, [#allocation24], 32, 32, 2
    $region121: #{decoder_forward.1} parent=1 // pred_fallthru
      _
    // Predicated region
    $region122: #{decoder_forward.1} parent=1 // pred_check
      _
    $region123: #{decoder_forward.1} parent=1 // pred_check_branch
      %789 = sbr.rel (0) target = $region125
    $region124: #{decoder_forward.1} parent=1 // pred_region
      _
    $region125: #{decoder_forward.1} parent=1 // pred_fallthru
      _
    // Predicated region
    $region126: #{decoder_forward.1} parent=1 // pred_check
      _
    $region127: #{decoder_forward.1} parent=1 // pred_check_branch
      %791 = sbr.rel (0) target = $region129
    $region128: #{decoder_forward.1} parent=1 // pred_region
      %793 = dma.done [#allocation9], 64
    $region129: #{decoder_forward.1} parent=1 // pred_fallthru
      _
    // Predicated region
    $region130: #{decoder_forward.1} parent=1 // pred_check
      _
    $region131: #{decoder_forward.1} parent=1 // pred_check_branch
      %795 = sbr.rel (0) target = $region133
    $region132: #{decoder_forward.1} parent=1 // pred_region
      %797 = dma.done [#allocation24], 64
    $region133: #{decoder_forward.1} parent=1 // pred_fallthru
      _
    %798 = vsyncpa [#allocation8], 1
    %799 = vsyncpa [#allocation11], 1
    %800 = vsyncpa [#allocation14], 1
    %801 = vsyncpa [#allocation17], 1
    %802 = vsyncpa [#allocation20], 1
    %803 = vsyncpa [#allocation9], 1
    %804 = vsyncpa [#allocation24], 1

</llo_original>
